<compile_context>
chip_gen: v7x
topology: tpu7x:2x2x1
jax: 0.10.0
libtpu: 0.0.40
codegen_flags: <defaults>
</compile_context>

<pallas_src>
import math

import jax
import jax.numpy as jnp
from jax.experimental import pallas as pl
from jax.experimental.pallas import tpu as pltpu

LANE = 128


def _ru(n: int, m: int) -> int:
    """Round n up to a multiple of m."""
    return ((n + m - 1) // m) * m


# ----------------------------------------------------------------------------
# Kernels (all weights already transposed to (in, out); eff_w already masked).
# ----------------------------------------------------------------------------
def _transfer_kernel_h2(x_ref, effw_ref, b0_ref, w1t_ref, b1_ref,
                        w2t_ref, b2_ref, wot_ref, bo_ref, o_ref):
    """Fused forward for one batch tile (4 matmuls, H2 branch).

    x_ref    : (TB, in_p)        effw_ref : (in_p, out_p)
    w1t_ref  : (out_p, H1p)      w2t_ref  : (H1p, H2p)
    wot_ref  : (H2p, Dp)         biases   : (1, N) f32
    o_ref    : (TB, Dp) f32
    """
    t1 = jnp.dot(x_ref[...], effw_ref[...],
                 preferred_element_type=jnp.float32) + b0_ref[...]
    t1 = jnp.maximum(t1, 0.0).astype(w1t_ref.dtype)          # dropout1: identity
    h1 = jnp.dot(t1, w1t_ref[...],
                 preferred_element_type=jnp.float32) + b1_ref[...]
    h1 = jnp.maximum(h1, 0.0).astype(w2t_ref.dtype)           # dropout2: identity
    h2 = jnp.dot(h1, w2t_ref[...],
                 preferred_element_type=jnp.float32) + b2_ref[...]
    h2 = jnp.maximum(h2, 0.0).astype(wot_ref.dtype)           # dropout3: identity
    logits = jnp.dot(h2, wot_ref[...],
                     preferred_element_type=jnp.float32) + bo_ref[...]
    o_ref[...] = jax.nn.sigmoid(logits).astype(o_ref.dtype)


def _transfer_kernel_noh2(x_ref, effw_ref, b0_ref, w1t_ref, b1_ref,
                          wot_ref, bo_ref, o_ref):
    """Fused forward for one batch tile (3 matmuls, H2 is None)."""
    t1 = jnp.dot(x_ref[...], effw_ref[...],
                 preferred_element_type=jnp.float32) + b0_ref[...]
    t1 = jnp.maximum(t1, 0.0).astype(w1t_ref.dtype)          # dropout1: identity
    h1 = jnp.dot(t1, w1t_ref[...],
                 preferred_element_type=jnp.float32) + b1_ref[...]
    h1 = jnp.maximum(h1, 0.0).astype(wot_ref.dtype)           # dropout2: identity
    logits = jnp.dot(h1, wot_ref[...],
                     preferred_element_type=jnp.float32) + bo_ref[...]
    o_ref[...] = jax.nn.sigmoid(logits).astype(o_ref.dtype)


# ----------------------------------------------------------------------------
# Parameter preparation (grid-invariant work hoisted out of the kernel).
# ----------------------------------------------------------------------------
def prepare_params(adj, params, *, compute_dtype=jnp.float32):
    """Build lane-padded, pre-transposed, pre-masked kernel parameters."""
    in_dims, out_dims = adj.shape

    def pad2(a, rows, cols):
        return jnp.pad(a, ((0, rows - a.shape[0]), (0, cols - a.shape[1])))

    in_p = _ru(in_dims, LANE)
    out_p = _ru(out_dims, LANE)

    # MultiOmicsLayer: effective masked weight, computed once (not per tile).
    eff_w = params["wso"].T * adj                                   # (in, out)

    prepped = {
        "eff_w": pad2(eff_w, in_p, out_p).astype(compute_dtype),
        "b0": pad2(params["bso"], 1, out_p).astype(jnp.float32),
    }

    H1 = params["w1"].shape[0]
    H1p = _ru(H1, LANE)
    prepped["w1t"] = pad2(params["w1"].T, out_p, H1p).astype(compute_dtype)
    prepped["b1"] = pad2(params["b1"], 1, H1p).astype(jnp.float32)

    has_h2 = "w2" in params
    if has_h2:
        H2 = params["w2"].shape[0]
        H2p = _ru(H2, LANE)
        prepped["w2t"] = pad2(params["w2"].T, H1p, H2p).astype(compute_dtype)
        prepped["b2"] = pad2(params["b2"], 1, H2p).astype(jnp.float32)
        last_in_p = H2p
    else:
        last_in_p = H1p

    D_out = params["wo"].shape[0]
    D_out_p = _ru(D_out, LANE)
    prepped["wot"] = pad2(params["wo"].T, last_in_p, D_out_p).astype(compute_dtype)
    prepped["bo"] = pad2(params["bo"], 1, D_out_p).astype(jnp.float32)

    meta = dict(in_dims=in_dims, in_p=in_p, D_out=D_out, D_out_p=D_out_p,
                has_h2=has_h2)
    return prepped, meta


# ----------------------------------------------------------------------------
# Wrapper: tiles over the (padded) batch dimension; weights passed whole.
# ----------------------------------------------------------------------------
def transfer_module_forward(x, prepped, meta, *, tb=128):
    B, in_dims = x.shape
    assert in_dims == meta["in_dims"]
    in_p, D_out, D_out_p = meta["in_p"], meta["D_out"], meta["D_out_p"]
    compute_dtype = prepped["eff_w"].dtype

    # Batch tile: multiple of 8, at most the (rounded-up) batch.
    tb = max(8, min(tb, _ru(B, 8)))
    Bp = _ru(B, tb)

    # Pad batch + feature dim, cast once in the wrapper (not per grid step).
    x_p = jnp.pad(x, ((0, Bp - B), (0, in_p - in_dims))).astype(compute_dtype)

    if meta["has_h2"]:
        kernel = _transfer_kernel_h2
        w_args = [prepped["eff_w"], prepped["b0"],
                  prepped["w1t"], prepped["b1"],
                  prepped["w2t"], prepped["b2"],
                  prepped["wot"], prepped["bo"]]
    else:
        kernel = _transfer_kernel_noh2
        w_args = [prepped["eff_w"], prepped["b0"],
                  prepped["w1t"], prepped["b1"],
                  prepped["wot"], prepped["bo"]]

    def const_spec(a):
        return pl.BlockSpec(a.shape, lambda i: (0, 0))

    out = pl.pallas_call(
        kernel,
        out_shape=jax.ShapeDtypeStruct((Bp, D_out_p), jnp.float32),
        grid_spec=pltpu.PrefetchScalarGridSpec(
            num_scalar_prefetch=0,
            grid=(Bp // tb,),
            in_specs=[pl.BlockSpec((tb, in_p), lambda i: (i, 0))]
                     + [const_spec(a) for a in w_args],
            out_specs=pl.BlockSpec((tb, D_out_p), lambda i: (i, 0)),
        ),
        compiler_params=pltpu.CompilerParams(
            dimension_semantics=("parallel",),
            vmem_limit_bytes=48 * 1024 * 1024,
        ),
    )(x_p, *w_args)

    # Strip batch + lane padding.
    return out[:B, :D_out]


# ----------------------------------------------------------------------------
# Reference model (pure JAX) + PyTorch-style initialization.
# ----------------------------------------------------------------------------
def _init_linear(key, out_f, in_f):
    """Mimic PyTorch kaiming_uniform_(a=sqrt(5)) + uniform bias init."""
    kw, kb = jax.random.split(key)
    bound = 1.0 / math.sqrt(in_f)
    w = jax.random.uniform(kw, (out_f, in_f), jnp.float32, -bound, bound)
    b = jax.random.uniform(kb, (1, out_f), jnp.float32, -bound, bound)
    return w, b


def init_params(key, in_dims, out_dims, H1, H2, D_out):
    k0, k1, k2, k3 = jax.random.split(key, 4)
    wso, bso = _init_linear(k0, out_dims, in_dims)       # MultiOmicsLayer
    w1, b1 = _init_linear(k1, H1, out_dims)              # hidden1
    p = dict(wso=wso, bso=bso, w1=w1, b1=b1)
    if H2 is not None:
        p["w2"], p["b2"] = _init_linear(k2, H2, H1)      # hidden2
        p["wo"], p["bo"] = _init_linear(k3, D_out, H2)   # output
    else:
        p["wo"], p["bo"] = _init_linear(k3, D_out, H1)   # output
    return p


def reference_forward(x, adj, p):
    t1 = jnp.maximum(x @ (p["wso"].T * adj) + p["bso"], 0.0)
    h = jnp.maximum(t1 @ p["w1"].T + p["b1"], 0.0)
    if "w2" in p:
        h = jnp.maximum(h @ p["w2"].T + p["b2"], 0.0)
    return jax.nn.sigmoid(h @ p["wo"].T + p["bo"])


if __name__ == "__main__":
    # Batch NOT a multiple of the tile (exercises the padded/ragged path),
    # feature dims not lane-aligned (exercise the 128-padding path).
    B, in_dims, out_dims, H1, H2, D_out = 250, 200, 300, 100, 64, 10

    key = jax.random.PRNGKey(0)
    kx, kadj, kp = jax.random.split(key, 3)

    x = jax.random.normal(kx, (B, in_dims), jnp.float32)
    adj = (jax.random.uniform(kadj, (in_dims, out_dims)) > 0.5).astype(jnp.float32)
    params = init_params(kp, in_dims, out_dims, H1, H2, D_out)
    y_ref = reference_forward(x, adj, params)

    # 1) f32 compute path (exact vs reference).
    prepped, meta = prepare_params(adj, params, compute_dtype=jnp.float32)
    y = jax.block_until_ready(transfer_module_forward(x, prepped, meta, tb=128))
    assert y.shape == (B, D_out)
    assert jnp.allclose(y, y_ref, atol=1e-5, rtol=1e-5)

    # 2) bf16 compute path (f32 MXU accumulation; loose tolerance).
    prepped_bf, meta_bf = prepare_params(adj, params, compute_dtype=jnp.bfloat16)
    y_bf = jax.block_until_ready(transfer_module_forward(x, prepped_bf, meta_bf, tb=128))
    assert jnp.allclose(y_bf, y_ref, atol=5e-2)

    # 3) H2=None variant (3-layer branch of TransferModuleBase).
    params_nh = init_params(jax.random.PRNGKey(1), in_dims, out_dims, H1, None, D_out)
    y_ref_nh = reference_forward(x, adj, params_nh)
    prepped_nh, meta_nh = prepare_params(adj, params_nh, compute_dtype=jnp.float32)
    y_nh = jax.block_until_ready(transfer_module_forward(x, prepped_nh, meta_nh, tb=128))
    assert jnp.allclose(y_nh, y_ref_nh, atol=1e-5, rtol=1e-5)

    print("KERNEL_OK")
</pallas_src>

<mosaic_0001>
module attributes {stable_mosaic.version = 11 : i64} {
  func.func @_transfer_kernel_h2(%arg0: i32, %arg1: memref<128x256xf32, #tpu.memory_space<vmem>>, %arg2: memref<256x384xf32, #tpu.memory_space<vmem>>, %arg3: memref<1x384xf32, #tpu.memory_space<vmem>>, %arg4: memref<384x128xf32, #tpu.memory_space<vmem>>, %arg5: memref<1x128xf32, #tpu.memory_space<vmem>>, %arg6: memref<128x128xf32, #tpu.memory_space<vmem>>, %arg7: memref<1x128xf32, #tpu.memory_space<vmem>>, %arg8: memref<128x128xf32, #tpu.memory_space<vmem>>, %arg9: memref<1x128xf32, #tpu.memory_space<vmem>>, %arg10: memref<128x128xf32, #tpu.memory_space<vmem>>) attributes {dimension_semantics = [#tpu.dimension_semantics<parallel>], iteration_bounds = array<i64: 2>, scalar_prefetch = 0 : i64, scratch_operands = 0 : i64, tpu.core_type = #tpu.core_type<tc>, window_params = [{transform_indices = @transform_0, window_bounds = array<i64: 128, 256>}, {pipeline_mode = #tpu.pipeline_mode<synchronous>, transform_indices = @transform_1, window_bounds = array<i64: 256, 384>}, {pipeline_mode = #tpu.pipeline_mode<synchronous>, transform_indices = @transform_2, window_bounds = array<i64: 1, 384>}, {pipeline_mode = #tpu.pipeline_mode<synchronous>, transform_indices = @transform_3, window_bounds = array<i64: 384, 128>}, {pipeline_mode = #tpu.pipeline_mode<synchronous>, transform_indices = @transform_4, window_bounds = array<i64: 1, 128>}, {pipeline_mode = #tpu.pipeline_mode<synchronous>, transform_indices = @transform_5, window_bounds = array<i64: 128, 128>}, {pipeline_mode = #tpu.pipeline_mode<synchronous>, transform_indices = @transform_6, window_bounds = array<i64: 1, 128>}, {pipeline_mode = #tpu.pipeline_mode<synchronous>, transform_indices = @transform_7, window_bounds = array<i64: 128, 128>}, {pipeline_mode = #tpu.pipeline_mode<synchronous>, transform_indices = @transform_8, window_bounds = array<i64: 1, 128>}, {transform_indices = @transform_9, window_bounds = array<i64: 128, 128>}]} {
    %c0 = arith.constant 0 : index
    %c0_0 = arith.constant 0 : index
    %0 = vector.load %arg1[%c0, %c0_0] : memref<128x256xf32, #tpu.memory_space<vmem>>, vector<128x256xf32>
    %c0_1 = arith.constant 0 : index
    %c0_2 = arith.constant 0 : index
    %1 = vector.load %arg2[%c0_1, %c0_2] : memref<256x384xf32, #tpu.memory_space<vmem>>, vector<256x384xf32>
    %cst = arith.constant dense<0.000000e+00> : vector<128x384xf32>
    %2 = tpu.matmul %0, %1, %cst {dimension_numbers = #tpu.dot_dimension_numbers<[1], [0], [0], [1], [0, 0, 1, 1], [], []>} : vector<128x256xf32>, vector<256x384xf32>, vector<128x384xf32> -> vector<128x384xf32>
    %c0_3 = arith.constant 0 : index
    %c0_4 = arith.constant 0 : index
    %3 = vector.load %arg3[%c0_3, %c0_4] : memref<1x384xf32, #tpu.memory_space<vmem>>, vector<1x384xf32>
    %4 = vector.broadcast %3 : vector<1x384xf32> to vector<128x384xf32>
    %5 = arith.addf %2, %4 : vector<128x384xf32>
    %cst_5 = arith.constant 0.000000e+00 : f32
    %6 = vector.broadcast %cst_5 : f32 to vector<128x384xf32>
    %7 = arith.maximumf %5, %6 : vector<128x384xf32>
    %c0_6 = arith.constant 0 : index
    %c0_7 = arith.constant 0 : index
    %8 = vector.load %arg4[%c0_6, %c0_7] : memref<384x128xf32, #tpu.memory_space<vmem>>, vector<384x128xf32>
    %cst_8 = arith.constant dense<0.000000e+00> : vector<128x128xf32>
    %9 = tpu.matmul %7, %8, %cst_8 {dimension_numbers = #tpu.dot_dimension_numbers<[1], [0], [0], [1], [0, 0, 1, 1], [], []>} : vector<128x384xf32>, vector<384x128xf32>, vector<128x128xf32> -> vector<128x128xf32>
    %c0_9 = arith.constant 0 : index
    %c0_10 = arith.constant 0 : index
    %10 = vector.load %arg5[%c0_9, %c0_10] : memref<1x128xf32, #tpu.memory_space<vmem>>, vector<1x128xf32>
    %11 = vector.broadcast %10 : vector<1x128xf32> to vector<128x128xf32>
    %12 = arith.addf %9, %11 : vector<128x128xf32>
    %cst_11 = arith.constant 0.000000e+00 : f32
    %13 = vector.broadcast %cst_11 : f32 to vector<128x128xf32>
    %14 = arith.maximumf %12, %13 : vector<128x128xf32>
    %c0_12 = arith.constant 0 : index
    %c0_13 = arith.constant 0 : index
    %15 = vector.load %arg6[%c0_12, %c0_13] : memref<128x128xf32, #tpu.memory_space<vmem>>, vector<128x128xf32>
    %cst_14 = arith.constant dense<0.000000e+00> : vector<128x128xf32>
    %16 = tpu.matmul %14, %15, %cst_14 {dimension_numbers = #tpu.dot_dimension_numbers<[1], [0], [0], [1], [0, 0, 1, 1], [], []>} : vector<128x128xf32>, vector<128x128xf32>, vector<128x128xf32> -> vector<128x128xf32>
    %c0_15 = arith.constant 0 : index
    %c0_16 = arith.constant 0 : index
    %17 = vector.load %arg7[%c0_15, %c0_16] : memref<1x128xf32, #tpu.memory_space<vmem>>, vector<1x128xf32>
    %18 = vector.broadcast %17 : vector<1x128xf32> to vector<128x128xf32>
    %19 = arith.addf %16, %18 : vector<128x128xf32>
    %cst_17 = arith.constant 0.000000e+00 : f32
    %20 = vector.broadcast %cst_17 : f32 to vector<128x128xf32>
    %21 = arith.maximumf %19, %20 : vector<128x128xf32>
    %c0_18 = arith.constant 0 : index
    %c0_19 = arith.constant 0 : index
    %22 = vector.load %arg8[%c0_18, %c0_19] : memref<128x128xf32, #tpu.memory_space<vmem>>, vector<128x128xf32>
    %cst_20 = arith.constant dense<0.000000e+00> : vector<128x128xf32>
    %23 = tpu.matmul %21, %22, %cst_20 {dimension_numbers = #tpu.dot_dimension_numbers<[1], [0], [0], [1], [0, 0, 1, 1], [], []>} : vector<128x128xf32>, vector<128x128xf32>, vector<128x128xf32> -> vector<128x128xf32>
    %c0_21 = arith.constant 0 : index
    %c0_22 = arith.constant 0 : index
    %24 = vector.load %arg9[%c0_21, %c0_22] : memref<1x128xf32, #tpu.memory_space<vmem>>, vector<1x128xf32>
    %25 = vector.broadcast %24 : vector<1x128xf32> to vector<128x128xf32>
    %26 = arith.addf %23, %25 : vector<128x128xf32>
    %27 = arith.negf %26 : vector<128x128xf32>
    %28 = math.exp %27 : vector<128x128xf32>
    %cst_23 = arith.constant 1.000000e+00 : f32
    %29 = vector.broadcast %cst_23 : f32 to vector<128x128xf32>
    %30 = arith.addf %29, %28 : vector<128x128xf32>
    %31 = arith.divf %29, %30 : vector<128x128xf32>
    %c0_24 = arith.constant 0 : index
    %c0_25 = arith.constant 0 : index
    %32 = vector.load %arg10[%c0_24, %c0_25] : memref<128x128xf32, #tpu.memory_space<vmem>>, vector<128x128xf32>
    tpu.vector_store %arg10[%c0_24, %c0_25], %31 {strides = array<i32>} : memref<128x128xf32, #tpu.memory_space<vmem>>, vector<128x128xf32>,
    return
  }
  func.func @transform_0(%arg0: i32) -> (i32, i32) {
    %c0_i32 = arith.constant 0 : i32
    %c0_i32_0 = arith.constant 0 : i32
    return %arg0, %c0_i32 : i32, i32
  }
  func.func @transform_1(%arg0: i32) -> (i32, i32) {
    %c0_i32 = arith.constant 0 : i32
    %c0_i32_0 = arith.constant 0 : i32
    %c0_i32_1 = arith.constant 0 : i32
    return %c0_i32, %c0_i32_0 : i32, i32
  }
  func.func @transform_2(%arg0: i32) -> (i32, i32) {
    %c0_i32 = arith.constant 0 : i32
    %c0_i32_0 = arith.constant 0 : i32
    %c0_i32_1 = arith.constant 0 : i32
    return %c0_i32, %c0_i32_0 : i32, i32
  }
  func.func @transform_3(%arg0: i32) -> (i32, i32) {
    %c0_i32 = arith.constant 0 : i32
    %c0_i32_0 = arith.constant 0 : i32
    %c0_i32_1 = arith.constant 0 : i32
    return %c0_i32, %c0_i32_0 : i32, i32
  }
  func.func @transform_4(%arg0: i32) -> (i32, i32) {
    %c0_i32 = arith.constant 0 : i32
    %c0_i32_0 = arith.constant 0 : i32
    %c0_i32_1 = arith.constant 0 : i32
    return %c0_i32, %c0_i32_0 : i32, i32
  }
  func.func @transform_5(%arg0: i32) -> (i32, i32) {
    %c0_i32 = arith.constant 0 : i32
    %c0_i32_0 = arith.constant 0 : i32
    %c0_i32_1 = arith.constant 0 : i32
    return %c0_i32, %c0_i32_0 : i32, i32
  }
  func.func @transform_6(%arg0: i32) -> (i32, i32) {
    %c0_i32 = arith.constant 0 : i32
    %c0_i32_0 = arith.constant 0 : i32
    %c0_i32_1 = arith.constant 0 : i32
    return %c0_i32, %c0_i32_0 : i32, i32
  }
  func.func @transform_7(%arg0: i32) -> (i32, i32) {
    %c0_i32 = arith.constant 0 : i32
    %c0_i32_0 = arith.constant 0 : i32
    %c0_i32_1 = arith.constant 0 : i32
    return %c0_i32, %c0_i32_0 : i32, i32
  }
  func.func @transform_8(%arg0: i32) -> (i32, i32) {
    %c0_i32 = arith.constant 0 : i32
    %c0_i32_0 = arith.constant 0 : i32
    %c0_i32_1 = arith.constant 0 : i32
    return %c0_i32, %c0_i32_0 : i32, i32
  }
  func.func @transform_9(%arg0: i32) -> (i32, i32) {
    %c0_i32 = arith.constant 0 : i32
    %c0_i32_0 = arith.constant 0 : i32
    return %arg0, %c0_i32 : i32, i32
  }
}

</mosaic_0001>

<llo_original>
// kernel: tpu_custom_call.1
$region0: #{tpu_custom_call.1}
  #allocation0 [shape = 'u32[]', space=smem, size = 0x4, offset = 0x4, fixed_abs, tag = 'smem constant byte address 0x4 - core index']
  #allocation1 [shape = 'u32[144,128]{1,0:T(1,128)}', space=vmem, size = 0x12000, scoped, tag = 'internal scratch']
  %s0 = inlined_call_operand.hbm [shape: f32[256,256], index: 0, kind: input, shape index: {}]
  %s1 = inlined_call_operand.hbm [shape: f32[256,384], index: 1, kind: input, shape index: {}]
  %s2 = inlined_call_operand.vmem [shape: f32[1,384], index: 2, kind: input, shape index: {}]
  %s3 = inlined_call_operand.hbm [shape: f32[384,128], index: 3, kind: input, shape index: {}]
  %s4 = inlined_call_operand.vmem [shape: f32[1,128], index: 4, kind: input, shape index: {}]
  %s5 = inlined_call_operand.hbm [shape: f32[128,128], index: 5, kind: input, shape index: {}]
  %s6 = inlined_call_operand.vmem [shape: f32[1,128], index: 6, kind: input, shape index: {}]
  %s7 = inlined_call_operand.hbm [shape: f32[128,128], index: 7, kind: input, shape index: {}]
  %s8 = inlined_call_operand.vmem [shape: f32[1,128], index: 8, kind: input, shape index: {}]
  %s9 = inlined_call_operand.hbm [shape: f32[256,128], index: 9, kind: output, shape index: {}]
  %s10 = sld [smem:[#allocation0]]
  $region89: #{tpu_custom_call.1} parent=0
    _
  %s12 = ssub.s32 1, %s10
  %s13 = scalar_select 0, %s12, %s10
  $region1: #{tpu_custom_call.1} parent=0
    #allocation2 [shape = 'u8[262144]{0}', space=vmem, size = 0x40000, scoped, tag = 'input window, operand 0']
    #allocation3 [shape = 's32[2]{0}', space=sflag, size = 0x8, scoped, tag = 'scoped memory for tpu_custom_call.1']
    #allocation4 [shape = 's32[2]{0}', space=sflag, size = 0x8, scoped, tag = 'scoped memory for tpu_custom_call.1']
    #allocation5 [shape = 'u8[393216]{0}', space=vmem, size = 0x60000, scoped, tag = 'input window, operand 1, single buffered']
    #allocation6 [shape = 's32[1]{0}', space=sflag, size = 0x4, scoped, tag = 'scoped memory for tpu_custom_call.1']
    #allocation7 [shape = 'u8[196608]{0}', space=vmem, size = 0x30000, scoped, tag = 'input window, operand 3, single buffered']
    #allocation8 [shape = 'u8[65536]{0}', space=vmem, size = 0x10000, scoped, tag = 'input window, operand 5, single buffered']
    #allocation9 [shape = 's32[1]{0}', space=sflag, size = 0x4, scoped, tag = 'scoped memory for tpu_custom_call.1']
    #allocation10 [shape = 'u8[65536]{0}', space=vmem, size = 0x10000, scoped, tag = 'input window, operand 7, single buffered']
    #allocation11 [shape = 'u8[131072]{0}', space=vmem, size = 0x20000, scoped, tag = 'output window, operand 0']
    %14 = vsyncpa [#allocation3], 0
    %s15 = scalar_lea.sflag [#allocation3], 1
    %16 = vsyncpa %s15, 0
    %17 = vsyncpa [#allocation6], 0
    %18 = vsyncpa [#allocation9], 0
    %19 = vsyncpa [#allocation4], 0
    %s20 = scalar_lea.sflag [#allocation4], 1
    %21 = vsyncpa %s20, 0
    loop: start=0, step=1, limit=4
    $region2: #{tpu_custom_call.1} parent=1 // loop_pre_header
      _
    $region3: #{tpu_custom_call.1} parent=1 // loop_header
      %s23 = sphi 0, %s27
      %p24 = scmp.ge.s32.totalorder %s23, 4
      %s33 = sphi 0, %s35
      %s36 = sphi 0, %s33
      %s37 = sphi 0, %s36
      %s53 = sphi 0, %s37
      %s57 = sphi 0, %s57
      %s59 = sphi 0, %s57
      %s60 = sphi 0, %s59
      %s74 = sphi 0, %s60
      %s78 = sphi 0, %s78
      %s80 = sphi 0, %s78
      %s81 = sphi 0, %s80
      %s95 = sphi 0, %s81
      %s99 = sphi 0, %s99
      %s101 = sphi 0, %s99
      %s102 = sphi 0, %s101
      %s116 = sphi 0, %s102
      %s120 = sphi 0, %s120
      %s122 = sphi 0, %s120
      %s123 = sphi 0, %s122
      %s137 = sphi 0, %s123
      %s141 = sphi 0, %s141
      %s143 = sphi 0, %s141
      %s144 = sphi 0, %s143
      %s158 = sphi 0, %s144
      %s162 = sphi 0, %s162
      %s164 = sphi 0, %s162
      %s165 = sphi 0, %s164
      %s179 = sphi 0, %s165
      %s183 = sphi 0, %s183
      %s185 = sphi 0, %s183
      %s186 = sphi 0, %s185
      %s200 = sphi 0, %s186
      %s204 = sphi 0, %s204
      %s206 = sphi 0, %s204
      %s207 = sphi 0, %s206
      %s221 = sphi 0, %s207
      %s227 = sphi 0, %s229
      %s230 = sphi 0, %s227
      %s231 = sphi 0, %s230
      %s247 = sphi 0, %s231
    $region4: #{tpu_custom_call.1} parent=1 // loop_header_branch
      %26 = sbr.rel (%p24) target = $region8
    $region5: #{tpu_custom_call.1} parent=1 // loop_body
      %s28 = ssub.s32 %s23, 1
      %s29 = ssub.s32 %s23, 2
      %s30 = sadd.s32 %s23, 1
      %s31 = ssub.s32 %s23, %s30
      %p32 = scmp.eq.s32.totalorder %s31, 0
      %s34 = sadd.s32 %s33, 1
      %s35 = scalar_select %p32, %s33, %s34
      %p38 = pneg %p32
      %p39 = scmp.eq.s32.totalorder %s23, 1
      %p40 = por %p38, %p39
      %p41 = scmp.ne.s32.totalorder %s33, %s36
      %p42 = scmp.eq.s32.totalorder %s23, 0
      %p43 = por %p41, %p42
      %p44 = scmp.ne.s32.totalorder %s33, %s36
      %p45 = scmp.eq.s32.totalorder %s28, 1
      %p46 = por %p44, %p45
      %p47 = scmp.ne.s32.totalorder %s36, %s37
      %p48 = scmp.eq.s32.totalorder %s28, 0
      %p49 = por %p47, %p48
      %p50 = scmp.ne.s32.totalorder %s36, %s37
      %p51 = scmp.eq.s32.totalorder %s29, 1
      %p52 = por %p50, %p51
      %p54 = scmp.ne.s32.totalorder %s37, %s53
      %p55 = scmp.eq.s32.totalorder %s29, 0
      %p56 = por %p54, %p55
      %s58 = sadd.s32 %s57, 1
      %p61 = scmp.eq.s32.totalorder %s23, 1
      %p62 = scmp.ne.s32.totalorder %s57, %s59
      %p63 = scmp.eq.s32.totalorder %s23, 0
      %p64 = por %p62, %p63
      %p65 = scmp.ne.s32.totalorder %s57, %s59
      %p66 = scmp.eq.s32.totalorder %s28, 1
      %p67 = por %p65, %p66
      %p68 = scmp.ne.s32.totalorder %s59, %s60
      %p69 = scmp.eq.s32.totalorder %s28, 0
      %p70 = por %p68, %p69
      %p71 = scmp.ne.s32.totalorder %s59, %s60
      %p72 = scmp.eq.s32.totalorder %s29, 1
      %p73 = por %p71, %p72
      %p75 = scmp.ne.s32.totalorder %s60, %s74
      %p76 = scmp.eq.s32.totalorder %s29, 0
      %p77 = por %p75, %p76
      %s79 = sadd.s32 %s78, 1
      %p82 = scmp.eq.s32.totalorder %s23, 1
      %p83 = scmp.ne.s32.totalorder %s78, %s80
      %p84 = scmp.eq.s32.totalorder %s23, 0
      %p85 = por %p83, %p84
      %p86 = scmp.ne.s32.totalorder %s78, %s80
      %p87 = scmp.eq.s32.totalorder %s28, 1
      %p88 = por %p86, %p87
      %p89 = scmp.ne.s32.totalorder %s80, %s81
      %p90 = scmp.eq.s32.totalorder %s28, 0
      %p91 = por %p89, %p90
      %p92 = scmp.ne.s32.totalorder %s80, %s81
      %p93 = scmp.eq.s32.totalorder %s29, 1
      %p94 = por %p92, %p93
      %p96 = scmp.ne.s32.totalorder %s81, %s95
      %p97 = scmp.eq.s32.totalorder %s29, 0
      %p98 = por %p96, %p97
      %s100 = sadd.s32 %s99, 1
      %p103 = scmp.eq.s32.totalorder %s23, 1
      %p104 = scmp.ne.s32.totalorder %s99, %s101
      %p105 = scmp.eq.s32.totalorder %s23, 0
      %p106 = por %p104, %p105
      %p107 = scmp.ne.s32.totalorder %s99, %s101
      %p108 = scmp.eq.s32.totalorder %s28, 1
      %p109 = por %p107, %p108
      %p110 = scmp.ne.s32.totalorder %s101, %s102
      %p111 = scmp.eq.s32.totalorder %s28, 0
      %p112 = por %p110, %p111
      %p113 = scmp.ne.s32.totalorder %s101, %s102
      %p114 = scmp.eq.s32.totalorder %s29, 1
      %p115 = por %p113, %p114
      %p117 = scmp.ne.s32.totalorder %s102, %s116
      %p118 = scmp.eq.s32.totalorder %s29, 0
      %p119 = por %p117, %p118
      %s121 = sadd.s32 %s120, 1
      %p124 = scmp.eq.s32.totalorder %s23, 1
      %p125 = scmp.ne.s32.totalorder %s120, %s122
      %p126 = scmp.eq.s32.totalorder %s23, 0
      %p127 = por %p125, %p126
      %p128 = scmp.ne.s32.totalorder %s120, %s122
      %p129 = scmp.eq.s32.totalorder %s28, 1
      %p130 = por %p128, %p129
      %p131 = scmp.ne.s32.totalorder %s122, %s123
      %p132 = scmp.eq.s32.totalorder %s28, 0
      %p133 = por %p131, %p132
      %p134 = scmp.ne.s32.totalorder %s122, %s123
      %p135 = scmp.eq.s32.totalorder %s29, 1
      %p136 = por %p134, %p135
      %p138 = scmp.ne.s32.totalorder %s123, %s137
      %p139 = scmp.eq.s32.totalorder %s29, 0
      %p140 = por %p138, %p139
      %s142 = sadd.s32 %s141, 1
      %p145 = scmp.eq.s32.totalorder %s23, 1
      %p146 = scmp.ne.s32.totalorder %s141, %s143
      %p147 = scmp.eq.s32.totalorder %s23, 0
      %p148 = por %p146, %p147
      %p149 = scmp.ne.s32.totalorder %s141, %s143
      %p150 = scmp.eq.s32.totalorder %s28, 1
      %p151 = por %p149, %p150
      %p152 = scmp.ne.s32.totalorder %s143, %s144
      %p153 = scmp.eq.s32.totalorder %s28, 0
      %p154 = por %p152, %p153
      %p155 = scmp.ne.s32.totalorder %s143, %s144
      %p156 = scmp.eq.s32.totalorder %s29, 1
      %p157 = por %p155, %p156
      %p159 = scmp.ne.s32.totalorder %s144, %s158
      %p160 = scmp.eq.s32.totalorder %s29, 0
      %p161 = por %p159, %p160
      %s163 = sadd.s32 %s162, 1
      %p166 = scmp.eq.s32.totalorder %s23, 1
      %p167 = scmp.ne.s32.totalorder %s162, %s164
      %p168 = scmp.eq.s32.totalorder %s23, 0
      %p169 = por %p167, %p168
      %p170 = scmp.ne.s32.totalorder %s162, %s164
      %p171 = scmp.eq.s32.totalorder %s28, 1
      %p172 = por %p170, %p171
      %p173 = scmp.ne.s32.totalorder %s164, %s165
      %p174 = scmp.eq.s32.totalorder %s28, 0
      %p175 = por %p173, %p174
      %p176 = scmp.ne.s32.totalorder %s164, %s165
      %p177 = scmp.eq.s32.totalorder %s29, 1
      %p178 = por %p176, %p177
      %p180 = scmp.ne.s32.totalorder %s165, %s179
      %p181 = scmp.eq.s32.totalorder %s29, 0
      %p182 = por %p180, %p181
      %s184 = sadd.s32 %s183, 1
      %p187 = scmp.eq.s32.totalorder %s23, 1
      %p188 = scmp.ne.s32.totalorder %s183, %s185
      %p189 = scmp.eq.s32.totalorder %s23, 0
      %p190 = por %p188, %p189
      %p191 = scmp.ne.s32.totalorder %s183, %s185
      %p192 = scmp.eq.s32.totalorder %s28, 1
      %p193 = por %p191, %p192
      %p194 = scmp.ne.s32.totalorder %s185, %s186
      %p195 = scmp.eq.s32.totalorder %s28, 0
      %p196 = por %p194, %p195
      %p197 = scmp.ne.s32.totalorder %s185, %s186
      %p198 = scmp.eq.s32.totalorder %s29, 1
      %p199 = por %p197, %p198
      %p201 = scmp.ne.s32.totalorder %s186, %s200
      %p202 = scmp.eq.s32.totalorder %s29, 0
      %p203 = por %p201, %p202
      %s205 = sadd.s32 %s204, 1
      %p208 = scmp.eq.s32.totalorder %s23, 1
      %p209 = scmp.ne.s32.totalorder %s204, %s206
      %p210 = scmp.eq.s32.totalorder %s23, 0
      %p211 = por %p209, %p210
      %p212 = scmp.ne.s32.totalorder %s204, %s206
      %p213 = scmp.eq.s32.totalorder %s28, 1
      %p214 = por %p212, %p213
      %p215 = scmp.ne.s32.totalorder %s206, %s207
      %p216 = scmp.eq.s32.totalorder %s28, 0
      %p217 = por %p215, %p216
      %p218 = scmp.ne.s32.totalorder %s206, %s207
      %p219 = scmp.eq.s32.totalorder %s29, 1
      %p220 = por %p218, %p219
      %p222 = scmp.ne.s32.totalorder %s207, %s221
      %p223 = scmp.eq.s32.totalorder %s29, 0
      %p224 = por %p222, %p223
      %s225 = ssub.s32 %s23, %s30
      %p226 = scmp.eq.s32.totalorder %s225, 0
      %s228 = sadd.s32 %s227, 1
      %s229 = scalar_select %p226, %s227, %s228
      %p232 = pneg %p226
      %p233 = scmp.eq.s32.totalorder %s23, 1
      %p234 = por %p232, %p233
      %p235 = scmp.ne.s32.totalorder %s227, %s230
      %p236 = scmp.eq.s32.totalorder %s23, 0
      %p237 = por %p235, %p236
      %p238 = scmp.ne.s32.totalorder %s227, %s230
      %p239 = scmp.eq.s32.totalorder %s28, 1
      %p240 = por %p238, %p239
      %p241 = scmp.ne.s32.totalorder %s230, %s231
      %p242 = scmp.eq.s32.totalorder %s28, 0
      %p243 = por %p241, %p242
      %p244 = scmp.ne.s32.totalorder %s230, %s231
      %p245 = scmp.eq.s32.totalorder %s29, 1
      %p246 = por %p244, %p245
      %p248 = scmp.ne.s32.totalorder %s231, %s247
      %p249 = scmp.eq.s32.totalorder %s29, 0
      %p250 = por %p248, %p249
      %p251 = scmp.le.s32.totalorder 1, %s23
      %p252 = scmp.lt.s32.totalorder %s23, 3
      %p253 = pnand %p251, %p252
      %p254 = pneg %p253
      // Predicated region
      $region9: #{tpu_custom_call.1} parent=5 // pred_check
        _
      $region10: #{tpu_custom_call.1} parent=5 // pred_check_branch
        %256 = sbr.rel (%p253) target = $region12
      $region11: #{tpu_custom_call.1} parent=5 // pred_region
        %s257 = ssub.s32 %s23, 1
        // Predicated region
        $region13: #{tpu_custom_call.1} parent=11 // pred_check
          %p258 = pneg %p70
        $region14: #{tpu_custom_call.1} parent=11 // pred_check_branch
          %260 = sbr.rel (%p258) target = $region16
        $region15: #{tpu_custom_call.1} parent=11 // pred_region
          %s262 = ssub.s32 12288, 12288
          %263 = vsyncadd [#allocation6], %s262
          %s264 = sshll.u32 [#allocation5], 4
          %s265 = int_to_ptr.vmem [resolvable:$true] %s264
          %270 = dma.hbm_to_vmem [thread:$0]  %s1, 12288, %s265, [#allocation6], 384, 384, 24
        $region16: #{tpu_custom_call.1} parent=11 // pred_fallthru
          _
        // Predicated region
        $region17: #{tpu_custom_call.1} parent=11 // pred_check
          %p271 = pneg %p91
        $region18: #{tpu_custom_call.1} parent=11 // pred_check_branch
          %273 = sbr.rel (%p271) target = $region20
        $region19: #{tpu_custom_call.1} parent=11 // pred_region
          _
        $region20: #{tpu_custom_call.1} parent=11 // pred_fallthru
          _
        // Predicated region
        $region21: #{tpu_custom_call.1} parent=11 // pred_check
          %p274 = pneg %p112
        $region22: #{tpu_custom_call.1} parent=11 // pred_check_branch
          %276 = sbr.rel (%p274) target = $region24
        $region23: #{tpu_custom_call.1} parent=11 // pred_region
          %s278 = ssub.s32 6144, 6144
          %279 = vsyncadd [#allocation6], %s278
          %s280 = sshll.u32 [#allocation7], 4
          %s281 = int_to_ptr.vmem [resolvable:$true] %s280
          %286 = dma.hbm_to_vmem [thread:$0]  %s3, 6144, %s281, [#allocation6], 128, 128, 8
        $region24: #{tpu_custom_call.1} parent=11 // pred_fallthru
          _
        // Predicated region
        $region25: #{tpu_custom_call.1} parent=11 // pred_check
          %p287 = pneg %p133
        $region26: #{tpu_custom_call.1} parent=11 // pred_check_branch
          %289 = sbr.rel (%p287) target = $region28
        $region27: #{tpu_custom_call.1} parent=11 // pred_region
          _
        $region28: #{tpu_custom_call.1} parent=11 // pred_fallthru
          _
        // Predicated region
        $region29: #{tpu_custom_call.1} parent=11 // pred_check
          %p290 = pneg %p154
        $region30: #{tpu_custom_call.1} parent=11 // pred_check_branch
          %292 = sbr.rel (%p290) target = $region32
        $region31: #{tpu_custom_call.1} parent=11 // pred_region
          %s294 = ssub.s32 2048, 2048
          %295 = vsyncadd [#allocation9], %s294
          %s296 = sshll.u32 [#allocation8], 4
          %s297 = int_to_ptr.vmem [resolvable:$true] %s296
          %302 = dma.hbm_to_vmem [thread:$0]  %s5, 2048, %s297, [#allocation9], 128, 128, 8
        $region32: #{tpu_custom_call.1} parent=11 // pred_fallthru
          _
        // Predicated region
        $region33: #{tpu_custom_call.1} parent=11 // pred_check
          %p303 = pneg %p175
        $region34: #{tpu_custom_call.1} parent=11 // pred_check_branch
          %305 = sbr.rel (%p303) target = $region36
        $region35: #{tpu_custom_call.1} parent=11 // pred_region
          _
        $region36: #{tpu_custom_call.1} parent=11 // pred_fallthru
          _
        // Predicated region
        $region37: #{tpu_custom_call.1} parent=11 // pred_check
          %p306 = pneg %p196
        $region38: #{tpu_custom_call.1} parent=11 // pred_check_branch
          %308 = sbr.rel (%p306) target = $region40
        $region39: #{tpu_custom_call.1} parent=11 // pred_region
          %s310 = ssub.s32 2048, 2048
          %311 = vsyncadd [#allocation9], %s310
          %s312 = sshll.u32 [#allocation10], 4
          %s313 = int_to_ptr.vmem [resolvable:$true] %s312
          %318 = dma.hbm_to_vmem [thread:$0]  %s7, 2048, %s313, [#allocation9], 128, 128, 8
        $region40: #{tpu_custom_call.1} parent=11 // pred_fallthru
          _
        // Predicated region
        $region41: #{tpu_custom_call.1} parent=11 // pred_check
          %p319 = pneg %p217
        $region42: #{tpu_custom_call.1} parent=11 // pred_check_branch
          %321 = sbr.rel (%p319) target = $region44
        $region43: #{tpu_custom_call.1} parent=11 // pred_region
          _
        $region44: #{tpu_custom_call.1} parent=11 // pred_fallthru
          _
      $region12: #{tpu_custom_call.1} parent=5 // pred_fallthru
        _
      %p322 = scmp.lt.s32.totalorder %s23, 2
      // Predicated region
      $region45: #{tpu_custom_call.1} parent=5 // pred_check
        %p323 = pneg %p322
      $region46: #{tpu_custom_call.1} parent=5 // pred_check_branch
        %325 = sbr.rel (%p323) target = $region48
      $region47: #{tpu_custom_call.1} parent=5 // pred_region
        // Predicated region
        $region49: #{tpu_custom_call.1} parent=47 // pred_check
          %p326 = pneg %p43
        $region50: #{tpu_custom_call.1} parent=47 // pred_check_branch
          %328 = sbr.rel (%p326) target = $region52
        $region51: #{tpu_custom_call.1} parent=47 // pred_region
          %s329 = sand.u32 %s33, 1
          %s330 = scalar_lea.sflag [#allocation3], %s329
          %s331 = sand.u32 %s33, 1
          %s332 = smul.addr %s331, 256
          %s333 = scalar_lea.vmem [#allocation2], %s332
          %s334 = smul.u32 16, %s23
          %s336 = ssub.s32 4096, 4096
          %337 = vsyncadd %s330, %s336
          %s338 = smul.addr %s334, 2
          %s339 = smul.addr %s338, 128
          %s340 = scalar_lea.hbm %s0, %s339
          %s341 = sshll.u32 %s333, 4
          %s342 = int_to_ptr.vmem [resolvable:$true] %s341
          %347 = dma.hbm_to_vmem [thread:$0]  %s340, 4096, %s342, %s330, 256, 256, 16
        $region52: #{tpu_custom_call.1} parent=47 // pred_fallthru
          _
      $region48: #{tpu_custom_call.1} parent=5 // pred_fallthru
        _
      %p348 = scmp.le.s32.totalorder 1, %s23
      %p349 = scmp.lt.s32.totalorder %s23, 3
      %p350 = pnand %p348, %p349
      %p351 = pneg %p350
      // Predicated region
      $region53: #{tpu_custom_call.1} parent=5 // pred_check
        _
      $region54: #{tpu_custom_call.1} parent=5 // pred_check_branch
        %353 = sbr.rel (%p350) target = $region56
      $region55: #{tpu_custom_call.1} parent=5 // pred_region
        %s354 = ssub.s32 %s23, 1
        %s355 = sand.u32 %s36, 1
        %s356 = scalar_lea.sflag [#allocation3], %s355
        %s357 = sand.u32 %s36, 1
        %s358 = smul.addr %s357, 256
        %s359 = scalar_lea.vmem [#allocation2], %s358
        // Predicated region
        $region57: #{tpu_custom_call.1} parent=55 // pred_check
          %p360 = pneg %p49
        $region58: #{tpu_custom_call.1} parent=55 // pred_check_branch
          %362 = sbr.rel (%p360) target = $region60
        $region59: #{tpu_custom_call.1} parent=55 // pred_region
          %363 = dma.done %s356, 4096
        $region60: #{tpu_custom_call.1} parent=55 // pred_fallthru
          _
        // Predicated region
        $region61: #{tpu_custom_call.1} parent=55 // pred_check
          %p364 = pneg %p70
        $region62: #{tpu_custom_call.1} parent=55 // pred_check_branch
          %366 = sbr.rel (%p364) target = $region64
        $region63: #{tpu_custom_call.1} parent=55 // pred_region
          %367 = dma.done [#allocation6], 12288
        $region64: #{tpu_custom_call.1} parent=55 // pred_fallthru
          _
        // Predicated region
        $region65: #{tpu_custom_call.1} parent=55 // pred_check
          %p368 = pneg %p112
        $region66: #{tpu_custom_call.1} parent=55 // pred_check_branch
          %370 = sbr.rel (%p368) target = $region68
        $region67: #{tpu_custom_call.1} parent=55 // pred_region
          %371 = dma.done [#allocation6], 6144
        $region68: #{tpu_custom_call.1} parent=55 // pred_fallthru
          _
        // Predicated region
        $region69: #{tpu_custom_call.1} parent=55 // pred_check
          %p372 = pneg %p154
        $region70: #{tpu_custom_call.1} parent=55 // pred_check_branch
          %374 = sbr.rel (%p372) target = $region72
        $region71: #{tpu_custom_call.1} parent=55 // pred_region
          %375 = dma.done [#allocation9], 2048
        $region72: #{tpu_custom_call.1} parent=55 // pred_fallthru
          _
        // Predicated region
        $region73: #{tpu_custom_call.1} parent=55 // pred_check
          %p376 = pneg %p196
        $region74: #{tpu_custom_call.1} parent=55 // pred_check_branch
          %378 = sbr.rel (%p376) target = $region76
        $region75: #{tpu_custom_call.1} parent=55 // pred_region
          %379 = dma.done [#allocation9], 2048
        $region76: #{tpu_custom_call.1} parent=55 // pred_fallthru
          _
        %s380 = sand.u32 %s36, 1
        %s381 = scalar_lea.sflag [#allocation3], %s380
        %s382 = sand.u32 %s36, 1
        %s383 = smul.addr %s382, 256
        %s384 = scalar_lea.vmem [#allocation2], %s383
        %p385 = pneg %p49
        %p386 = pneg %p46
        %p387 = pneg %p70
        %p388 = pneg %p67
        %p389 = pneg %p91
        %p390 = pneg %p88
        %p391 = pneg %p112
        %p392 = pneg %p109
        %p393 = pneg %p133
        %p394 = pneg %p130
        %p395 = pneg %p154
        %p396 = pneg %p151
        %p397 = pneg %p175
        %p398 = pneg %p172
        %p399 = pneg %p196
        %p400 = pneg %p193
        %p401 = pneg %p217
        %p402 = pneg %p214
        %p403 = pneg %p243
        %p404 = pneg %p240
        %s405 = sand.u32 %s230, 1
        %s406 = scalar_lea.sflag [#allocation4], %s405
        %s407 = sand.u32 %s230, 1
        %s408 = smul.addr %s407, 128
        %s409 = scalar_lea.vmem [#allocation11], %s408
        %s410 = smul.u32 16, %s28
        %s411 = smul.u32 16, %s28
        %v412 = vld [vmem:[%s359] sm:$0xff]
        %v413 = vld [vmem:[%s359 + $0x8] sm:$0xff]
        %v414 = vld [vmem:[%s359 + $0x10] sm:$0xff]
        %v415 = vld [vmem:[%s359 + $0x18] sm:$0xff]
        %v416 = vld [vmem:[%s359 + $0x20] sm:$0xff]
        %v417 = vld [vmem:[%s359 + $0x28] sm:$0xff]
        %v418 = vld [vmem:[%s359 + $0x30] sm:$0xff]
        %v419 = vld [vmem:[%s359 + $0x38] sm:$0xff]
        %v420 = vld [vmem:[%s359 + $0x40] sm:$0xff]
        %v421 = vld [vmem:[%s359 + $0x48] sm:$0xff]
        %v422 = vld [vmem:[%s359 + $0x50] sm:$0xff]
        %v423 = vld [vmem:[%s359 + $0x58] sm:$0xff]
        %v424 = vld [vmem:[%s359 + $0x60] sm:$0xff]
        %v425 = vld [vmem:[%s359 + $0x68] sm:$0xff]
        %v426 = vld [vmem:[%s359 + $0x70] sm:$0xff]
        %v427 = vld [vmem:[%s359 + $0x78] sm:$0xff]
        %v428 = vld [vmem:[%s359 + $0x80] sm:$0xff]
        %v429 = vld [vmem:[%s359 + $0x88] sm:$0xff]
        %v430 = vld [vmem:[%s359 + $0x90] sm:$0xff]
        %v431 = vld [vmem:[%s359 + $0x98] sm:$0xff]
        %v432 = vld [vmem:[%s359 + $0xa0] sm:$0xff]
        %v433 = vld [vmem:[%s359 + $0xa8] sm:$0xff]
        %v434 = vld [vmem:[%s359 + $0xb0] sm:$0xff]
        %v435 = vld [vmem:[%s359 + $0xb8] sm:$0xff]
        %v436 = vld [vmem:[%s359 + $0xc0] sm:$0xff]
        %v437 = vld [vmem:[%s359 + $0xc8] sm:$0xff]
        %v438 = vld [vmem:[%s359 + $0xd0] sm:$0xff]
        %v439 = vld [vmem:[%s359 + $0xd8] sm:$0xff]
        %v440 = vld [vmem:[%s359 + $0xe0] sm:$0xff]
        %v441 = vld [vmem:[%s359 + $0xe8] sm:$0xff]
        %v442 = vld [vmem:[%s359 + $0xf0] sm:$0xff]
        %v443 = vld [vmem:[%s359 + $0xf8] sm:$0xff]
        %v444 = vld [vmem:[#allocation5] sm:$0xff]
        %v445 = vld [vmem:[#allocation5 + $0x8] sm:$0xff]
        %v446 = vld [vmem:[#allocation5 + $0x10] sm:$0xff]
        %v447 = vld [vmem:[#allocation5 + $0x18] sm:$0xff]
        %v448 = vld [vmem:[#allocation5 + $0x20] sm:$0xff]
        %v449 = vld [vmem:[#allocation5 + $0x28] sm:$0xff]
        %v450 = vld [vmem:[#allocation5 + $0x30] sm:$0xff]
        %v451 = vld [vmem:[#allocation5 + $0x38] sm:$0xff]
        %v452 = vld [vmem:[#allocation5 + $0x40] sm:$0xff]
        %v453 = vld [vmem:[#allocation5 + $0x48] sm:$0xff]
        %v454 = vld [vmem:[#allocation5 + $0x50] sm:$0xff]
        %v455 = vld [vmem:[#allocation5 + $0x58] sm:$0xff]
        %v456 = vld [vmem:[#allocation5 + $0x60] sm:$0xff]
        %v457 = vld [vmem:[#allocation5 + $0x68] sm:$0xff]
        %v458 = vld [vmem:[#allocation5 + $0x70] sm:$0xff]
        %v459 = vld [vmem:[#allocation5 + $0x78] sm:$0xff]
        %v460 = vld [vmem:[#allocation5 + $0x80] sm:$0xff]
        %v461 = vld [vmem:[#allocation5 + $0x88] sm:$0xff]
        %v462 = vld [vmem:[#allocation5 + $0x90] sm:$0xff]
        %v463 = vld [vmem:[#allocation5 + $0x98] sm:$0xff]
        %v464 = vld [vmem:[#allocation5 + $0xa0] sm:$0xff]
        %v465 = vld [vmem:[#allocation5 + $0xa8] sm:$0xff]
        %v466 = vld [vmem:[#allocation5 + $0xb0] sm:$0xff]
        %v467 = vld [vmem:[#allocation5 + $0xb8] sm:$0xff]
        %v468 = vld [vmem:[#allocation5 + $0xc0] sm:$0xff]
        %v469 = vld [vmem:[#allocation5 + $0xc8] sm:$0xff]
        %v470 = vld [vmem:[#allocation5 + $0xd0] sm:$0xff]
        %v471 = vld [vmem:[#allocation5 + $0xd8] sm:$0xff]
        %v472 = vld [vmem:[#allocation5 + $0xe0] sm:$0xff]
        %v473 = vld [vmem:[#allocation5 + $0xe8] sm:$0xff]
        %v474 = vld [vmem:[#allocation5 + $0xf0] sm:$0xff]
        %v475 = vld [vmem:[#allocation5 + $0xf8] sm:$0xff]
        %v476 = vld [vmem:[#allocation5 + $0x100] sm:$0xff]
        %v477 = vld [vmem:[#allocation5 + $0x108] sm:$0xff]
        %v478 = vld [vmem:[#allocation5 + $0x110] sm:$0xff]
        %v479 = vld [vmem:[#allocation5 + $0x118] sm:$0xff]
        %v480 = vld [vmem:[#allocation5 + $0x120] sm:$0xff]
        %v481 = vld [vmem:[#allocation5 + $0x128] sm:$0xff]
        %v482 = vld [vmem:[#allocation5 + $0x130] sm:$0xff]
        %v483 = vld [vmem:[#allocation5 + $0x138] sm:$0xff]
        %v484 = vld [vmem:[#allocation5 + $0x140] sm:$0xff]
        %v485 = vld [vmem:[#allocation5 + $0x148] sm:$0xff]
        %v486 = vld [vmem:[#allocation5 + $0x150] sm:$0xff]
        %v487 = vld [vmem:[#allocation5 + $0x158] sm:$0xff]
        %v488 = vld [vmem:[#allocation5 + $0x160] sm:$0xff]
        %v489 = vld [vmem:[#allocation5 + $0x168] sm:$0xff]
        %v490 = vld [vmem:[#allocation5 + $0x170] sm:$0xff]
        %v491 = vld [vmem:[#allocation5 + $0x178] sm:$0xff]
        %v492 = vld [vmem:[#allocation5 + $0x180] sm:$0xff]
        %v493 = vld [vmem:[#allocation5 + $0x188] sm:$0xff]
        %v494 = vld [vmem:[#allocation5 + $0x190] sm:$0xff]
        %v495 = vld [vmem:[#allocation5 + $0x198] sm:$0xff]
        %v496 = vld [vmem:[#allocation5 + $0x1a0] sm:$0xff]
        %v497 = vld [vmem:[#allocation5 + $0x1a8] sm:$0xff]
        %v498 = vld [vmem:[#allocation5 + $0x1b0] sm:$0xff]
        %v499 = vld [vmem:[#allocation5 + $0x1b8] sm:$0xff]
        %v500 = vld [vmem:[#allocation5 + $0x1c0] sm:$0xff]
        %v501 = vld [vmem:[#allocation5 + $0x1c8] sm:$0xff]
        %v502 = vld [vmem:[#allocation5 + $0x1d0] sm:$0xff]
        %v503 = vld [vmem:[#allocation5 + $0x1d8] sm:$0xff]
        %v504 = vld [vmem:[#allocation5 + $0x1e0] sm:$0xff]
        %v505 = vld [vmem:[#allocation5 + $0x1e8] sm:$0xff]
        %v506 = vld [vmem:[#allocation5 + $0x1f0] sm:$0xff]
        %v507 = vld [vmem:[#allocation5 + $0x1f8] sm:$0xff]
        %v508 = vld [vmem:[#allocation5 + $0x200] sm:$0xff]
        %v509 = vld [vmem:[#allocation5 + $0x208] sm:$0xff]
        %v510 = vld [vmem:[#allocation5 + $0x210] sm:$0xff]
        %v511 = vld [vmem:[#allocation5 + $0x218] sm:$0xff]
        %v512 = vld [vmem:[#allocation5 + $0x220] sm:$0xff]
        %v513 = vld [vmem:[#allocation5 + $0x228] sm:$0xff]
        %v514 = vld [vmem:[#allocation5 + $0x230] sm:$0xff]
        %v515 = vld [vmem:[#allocation5 + $0x238] sm:$0xff]
        %v516 = vld [vmem:[#allocation5 + $0x240] sm:$0xff]
        %v517 = vld [vmem:[#allocation5 + $0x248] sm:$0xff]
        %v518 = vld [vmem:[#allocation5 + $0x250] sm:$0xff]
        %v519 = vld [vmem:[#allocation5 + $0x258] sm:$0xff]
        %v520 = vld [vmem:[#allocation5 + $0x260] sm:$0xff]
        %v521 = vld [vmem:[#allocation5 + $0x268] sm:$0xff]
        %v522 = vld [vmem:[#allocation5 + $0x270] sm:$0xff]
        %v523 = vld [vmem:[#allocation5 + $0x278] sm:$0xff]
        %v524 = vld [vmem:[#allocation5 + $0x280] sm:$0xff]
        %v525 = vld [vmem:[#allocation5 + $0x288] sm:$0xff]
        %v526 = vld [vmem:[#allocation5 + $0x290] sm:$0xff]
        %v527 = vld [vmem:[#allocation5 + $0x298] sm:$0xff]
        %v528 = vld [vmem:[#allocation5 + $0x2a0] sm:$0xff]
        %v529 = vld [vmem:[#allocation5 + $0x2a8] sm:$0xff]
        %v530 = vld [vmem:[#allocation5 + $0x2b0] sm:$0xff]
        %v531 = vld [vmem:[#allocation5 + $0x2b8] sm:$0xff]
        %v532 = vld [vmem:[#allocation5 + $0x2c0] sm:$0xff]
        %v533 = vld [vmem:[#allocation5 + $0x2c8] sm:$0xff]
        %v534 = vld [vmem:[#allocation5 + $0x2d0] sm:$0xff]
        %v535 = vld [vmem:[#allocation5 + $0x2d8] sm:$0xff]
        %v536 = vld [vmem:[#allocation5 + $0x2e0] sm:$0xff]
        %v537 = vld [vmem:[#allocation5 + $0x2e8] sm:$0xff]
        %v538 = vld [vmem:[#allocation5 + $0x2f0] sm:$0xff]
        %v539 = vld [vmem:[#allocation5 + $0x2f8] sm:$0xff]
        %v540 = vld [vmem:[%s2] sm:$0x7]
        %v542 = vlaneseq
        %v543 = vshrl.u32 %v542, 7
        %v544 = vsub.s32 0, %v543
        %v545 = vrot.slane %v540, %v544
        %v546 = vlaneseq
        %v547 = vshrl.u32 %v546, 7
        %v548 = vsub.s32 1, %v547
        %v549 = vrot.slane %v540, %v548
        %v550 = vlaneseq
        %v551 = vshrl.u32 %v550, 7
        %v552 = vsub.s32 2, %v551
        %v553 = vrot.slane %v540, %v552
        %557 = vmatprep.subr.mxu0 %v445
        %558 = vmatpush1.msra.mxu0 %v444
        %559 = vmatprep.subr.mxu0 %v448
        %560 = vmatpush1.msra.mxu0 %v447
        %561 = vmatprep.subr.mxu0 %v451
        %562 = vmatpush1.msra.mxu0 %v450
        %563 = vmatprep.subr.mxu0 %v454
        %564 = vmatpush1.msra.mxu0 %v453
        %565 = vmatprep.subr.mxu0 %v457
        %566 = vmatpush1.msra.mxu0 %v456
        %567 = vmatprep.subr.mxu0 %v460
        %568 = vmatpush1.msra.mxu0 %v459
        %569 = vmatprep.subr.mxu0 %v463
        %570 = vmatpush1.msra.mxu0 %v462
        %571 = vmatprep.subr.mxu0 %v466
        %572 = vmatpush1.msra.mxu0 %v465
        %573 = vmatprep.subr.mxu0 %v469
        %574 = vmatpush1.msra.mxu0 %v468
        %575 = vmatprep.subr.mxu0 %v472
        %576 = vmatpush1.msra.mxu0 %v471
        %577 = vmatprep.subr.mxu0 %v475
        %578 = vmatpush1.msra.mxu0 %v474
        %579 = vmatprep.subr.mxu0 %v478
        %580 = vmatpush1.msra.mxu0 %v477
        %581 = vmatprep.subr.mxu0 %v481
        %582 = vmatpush1.msra.mxu0 %v480
        %583 = vmatprep.subr.mxu0 %v484
        %584 = vmatpush1.msra.mxu0 %v483
        %585 = vmatprep.subr.mxu0 %v487
        %586 = vmatpush1.msra.mxu0 %v486
        %587 = vmatprep.subr.mxu0 %v490
        %588 = vmatpush1.msra.mxu0 %v489
        %589 = vmatprep.subr.mxu0 %v493
        %590 = vmatpush1.msra.mxu0 %v492
        %591 = vmatprep.subr.mxu0 %v496
        %592 = vmatpush1.msra.mxu0 %v495
        %593 = vmatprep.subr.mxu0 %v499
        %594 = vmatpush1.msra.mxu0 %v498
        %595 = vmatprep.subr.mxu0 %v502
        %596 = vmatpush1.msra.mxu0 %v501
        %597 = vmatprep.subr.mxu0 %v505
        %598 = vmatpush1.msra.mxu0 %v504
        %599 = vmatprep.subr.mxu0 %v508
        %600 = vmatpush1.msra.mxu0 %v507
        %601 = vmatprep.subr.mxu0 %v511
        %602 = vmatpush1.msra.mxu0 %v510
        %603 = vmatprep.subr.mxu0 %v514
        %604 = vmatpush1.msra.mxu0 %v513
        %605 = vmatprep.subr.mxu0 %v517
        %606 = vmatpush1.msra.mxu0 %v516
        %607 = vmatprep.subr.mxu0 %v520
        %608 = vmatpush1.msra.mxu0 %v519
        %609 = vmatprep.subr.mxu0 %v523
        %610 = vmatpush1.msra.mxu0 %v522
        %611 = vmatprep.subr.mxu0 %v526
        %612 = vmatpush1.msra.mxu0 %v525
        %613 = vmatprep.subr.mxu0 %v529
        %614 = vmatpush1.msra.mxu0 %v528
        %615 = vmatprep.subr.mxu0 %v532
        %616 = vmatpush1.msra.mxu0 %v531
        %617 = vmatprep.subr.mxu0 %v535
        %618 = vmatpush1.msra.mxu0 %v534
        %619 = vmatprep.subr.mxu0 %v538
        %620 = vmatpush1.msra.mxu0 %v537
        %621 = vmatprep.mubr.f32.mxu0 %v413
        %622 = vmatmul.mubr.f32.gmra.mrb[0].mxu0 %v412
        %v623 = vpop.f32.mrb[0].mxu0
        %v624 = vadd.f32 %v545, %v623
        %v625 = vpop.f32.mrb[0].mxu0
        %v626 = vadd.f32 %v549, %v625
        %627 = vmatprep.mubr.f32.mxu0 %v415
        %628 = vmatmul.mubr.f32.gmra.mrb[0].mxu0 %v414
        %v629 = vpop.f32.mrb[0].mxu0
        %v630 = vadd.f32 %v545, %v629
        %v631 = vpop.f32.mrb[0].mxu0
        %v632 = vadd.f32 %v549, %v631
        %633 = vmatprep.mubr.f32.mxu0 %v417
        %634 = vmatmul.mubr.f32.gmra.mrb[0].mxu0 %v416
        %v635 = vpop.f32.mrb[0].mxu0
        %v636 = vadd.f32 %v545, %v635
        %v637 = vpop.f32.mrb[0].mxu0
        %v638 = vadd.f32 %v549, %v637
        %639 = vmatprep.mubr.f32.mxu0 %v419
        %640 = vmatmul.mubr.f32.gmra.mrb[0].mxu0 %v418
        %v641 = vpop.f32.mrb[0].mxu0
        %v642 = vadd.f32 %v545, %v641
        %v643 = vpop.f32.mrb[0].mxu0
        %v644 = vadd.f32 %v549, %v643
        %645 = vmatprep.mubr.f32.mxu0 %v421
        %646 = vmatmul.mubr.f32.gmra.mrb[0].mxu0 %v420
        %v647 = vpop.f32.mrb[0].mxu0
        %v648 = vadd.f32 %v545, %v647
        %v649 = vpop.f32.mrb[0].mxu0
        %v650 = vadd.f32 %v549, %v649
        %651 = vmatprep.mubr.f32.mxu0 %v423
        %652 = vmatmul.mubr.f32.gmra.mrb[0].mxu0 %v422
        %v653 = vpop.f32.mrb[0].mxu0
        %v654 = vadd.f32 %v545, %v653
        %v655 = vpop.f32.mrb[0].mxu0
        %v656 = vadd.f32 %v549, %v655
        %657 = vmatprep.mubr.f32.mxu0 %v425
        %658 = vmatmul.mubr.f32.gmra.mrb[0].mxu0 %v424
        %v659 = vpop.f32.mrb[0].mxu0
        %v660 = vadd.f32 %v545, %v659
        %v661 = vpop.f32.mrb[0].mxu0
        %v662 = vadd.f32 %v549, %v661
        %663 = vmatprep.mubr.f32.mxu0 %v427
        %664 = vmatmul.mubr.f32.gmra.mrb[0].mxu0 %v426
        %v665 = vpop.f32.mrb[0].mxu0
        %v666 = vadd.f32 %v545, %v665
        %v667 = vpop.f32.mrb[0].mxu0
        %v668 = vadd.f32 %v549, %v667
        %669 = vmatprep.mubr.f32.mxu0 %v429
        %670 = vmatmul.mubr.f32.gmra.mrb[0].mxu0 %v428
        %v671 = vpop.f32.mrb[0].mxu0
        %v672 = vadd.f32 %v545, %v671
        %v673 = vpop.f32.mrb[0].mxu0
        %v674 = vadd.f32 %v549, %v673
        %675 = vmatprep.mubr.f32.mxu0 %v431
        %676 = vmatmul.mubr.f32.gmra.mrb[0].mxu0 %v430
        %v677 = vpop.f32.mrb[0].mxu0
        %v678 = vadd.f32 %v545, %v677
        %v679 = vpop.f32.mrb[0].mxu0
        %v680 = vadd.f32 %v549, %v679
        %681 = vmatprep.mubr.f32.mxu0 %v433
        %682 = vmatmul.mubr.f32.gmra.mrb[0].mxu0 %v432
        %v683 = vpop.f32.mrb[0].mxu0
        %v684 = vadd.f32 %v545, %v683
        %v685 = vpop.f32.mrb[0].mxu0
        %v686 = vadd.f32 %v549, %v685
        %687 = vmatprep.mubr.f32.mxu0 %v435
        %688 = vmatmul.mubr.f32.gmra.mrb[0].mxu0 %v434
        %v689 = vpop.f32.mrb[0].mxu0
        %v690 = vadd.f32 %v545, %v689
        %v691 = vpop.f32.mrb[0].mxu0
        %v692 = vadd.f32 %v549, %v691
        %693 = vmatprep.mubr.f32.mxu0 %v437
        %694 = vmatmul.mubr.f32.gmra.mrb[0].mxu0 %v436
        %v695 = vpop.f32.mrb[0].mxu0
        %v696 = vadd.f32 %v545, %v695
        %v697 = vpop.f32.mrb[0].mxu0
        %v698 = vadd.f32 %v549, %v697
        %699 = vmatprep.mubr.f32.mxu0 %v439
        %700 = vmatmul.mubr.f32.gmra.mrb[0].mxu0 %v438
        %v701 = vpop.f32.mrb[0].mxu0
        %v702 = vadd.f32 %v545, %v701
        %v703 = vpop.f32.mrb[0].mxu0
        %v704 = vadd.f32 %v549, %v703
        %705 = vmatprep.mubr.f32.mxu0 %v441
        %706 = vmatmul.mubr.f32.gmra.mrb[0].mxu0 %v440
        %v707 = vpop.f32.mrb[0].mxu0
        %v708 = vadd.f32 %v545, %v707
        %v709 = vpop.f32.mrb[0].mxu0
        %v710 = vadd.f32 %v549, %v709
        %711 = vmatprep.mubr.f32.mxu0 %v443
        %712 = vmatmul.mubr.f32.gmra.mrb[0].mxu0 %v442
        %v713 = vpop.f32.mrb[0].mxu0
        %v714 = vadd.f32 %v545, %v713
        %v715 = vpop.f32.mrb[0].mxu0
        %v716 = vadd.f32 %v549, %v715
        %717 = vdwg.mxu0
        %718 = vmatprep.subr.mxu0 0.0
        %719 = vmatpush1.msra.mxu0 %v446
        %720 = vmatprep.subr.mxu0 0.0
        %721 = vmatpush1.msra.mxu0 %v449
        %722 = vmatprep.subr.mxu0 0.0
        %723 = vmatpush1.msra.mxu0 %v452
        %724 = vmatprep.subr.mxu0 0.0
        %725 = vmatpush1.msra.mxu0 %v455
        %726 = vmatprep.subr.mxu0 0.0
        %727 = vmatpush1.msra.mxu0 %v458
        %728 = vmatprep.subr.mxu0 0.0
        %729 = vmatpush1.msra.mxu0 %v461
        %730 = vmatprep.subr.mxu0 0.0
        %731 = vmatpush1.msra.mxu0 %v464
        %732 = vmatprep.subr.mxu0 0.0
        %733 = vmatpush1.msra.mxu0 %v467
        %734 = vmatprep.subr.mxu0 0.0
        %735 = vmatpush1.msra.mxu0 %v470
        %736 = vmatprep.subr.mxu0 0.0
        %737 = vmatpush1.msra.mxu0 %v473
        %738 = vmatprep.subr.mxu0 0.0
        %739 = vmatpush1.msra.mxu0 %v476
        %740 = vmatprep.subr.mxu0 0.0
        %741 = vmatpush1.msra.mxu0 %v479
        %742 = vmatprep.subr.mxu0 0.0
        %743 = vmatpush1.msra.mxu0 %v482
        %744 = vmatprep.subr.mxu0 0.0
        %745 = vmatpush1.msra.mxu0 %v485
        %746 = vmatprep.subr.mxu0 0.0
        %747 = vmatpush1.msra.mxu0 %v488
        %748 = vmatprep.subr.mxu0 0.0
        %749 = vmatpush1.msra.mxu0 %v491
        %750 = vmatprep.subr.mxu0 0.0
        %751 = vmatpush1.msra.mxu0 %v494
        %752 = vmatprep.subr.mxu0 0.0
        %753 = vmatpush1.msra.mxu0 %v497
        %754 = vmatprep.subr.mxu0 0.0
        %755 = vmatpush1.msra.mxu0 %v500
        %756 = vmatprep.subr.mxu0 0.0
        %757 = vmatpush1.msra.mxu0 %v503
        %758 = vmatprep.subr.mxu0 0.0
        %759 = vmatpush1.msra.mxu0 %v506
        %760 = vmatprep.subr.mxu0 0.0
        %761 = vmatpush1.msra.mxu0 %v509
        %762 = vmatprep.subr.mxu0 0.0
        %763 = vmatpush1.msra.mxu0 %v512
        %764 = vmatprep.subr.mxu0 0.0
        %765 = vmatpush1.msra.mxu0 %v515
        %766 = vmatprep.subr.mxu0 0.0
        %767 = vmatpush1.msra.mxu0 %v518
        %768 = vmatprep.subr.mxu0 0.0
        %769 = vmatpush1.msra.mxu0 %v521
        %770 = vmatprep.subr.mxu0 0.0
        %771 = vmatpush1.msra.mxu0 %v524
        %772 = vmatprep.subr.mxu0 0.0
        %773 = vmatpush1.msra.mxu0 %v527
        %774 = vmatprep.subr.mxu0 0.0
        %775 = vmatpush1.msra.mxu0 %v530
        %776 = vmatprep.subr.mxu0 0.0
        %777 = vmatpush1.msra.mxu0 %v533
        %778 = vmatprep.subr.mxu0 0.0
        %779 = vmatpush1.msra.mxu0 %v536
        %780 = vmatprep.subr.mxu0 0.0
        %781 = vmatpush1.msra.mxu0 %v539
        %782 = vmatprep.mubr.f32.mxu0 %v413
        %783 = vmatmul.mubr.f32.gmra.mrb[0].mxu0 %v412
        %v784 = vpop.f32.mrb[0].mxu0
        %v785 = vadd.f32 %v553, %v784
        %v786 = vpop.f32.mrb[0].mxu0
        %787 = vmatprep.mubr.f32.mxu0 %v415
        %788 = vmatmul.mubr.f32.gmra.mrb[0].mxu0 %v414
        %v789 = vpop.f32.mrb[0].mxu0
        %v790 = vadd.f32 %v553, %v789
        %v791 = vpop.f32.mrb[0].mxu0
        %792 = vmatprep.mubr.f32.mxu0 %v417
        %793 = vmatmul.mubr.f32.gmra.mrb[0].mxu0 %v416
        %v794 = vpop.f32.mrb[0].mxu0
        %v795 = vadd.f32 %v553, %v794
        %v796 = vpop.f32.mrb[0].mxu0
        %797 = vmatprep.mubr.f32.mxu0 %v419
        %798 = vmatmul.mubr.f32.gmra.mrb[0].mxu0 %v418
        %v799 = vpop.f32.mrb[0].mxu0
        %v800 = vadd.f32 %v553, %v799
        %v801 = vpop.f32.mrb[0].mxu0
        %802 = vmatprep.mubr.f32.mxu0 %v421
        %803 = vmatmul.mubr.f32.gmra.mrb[0].mxu0 %v420
        %v804 = vpop.f32.mrb[0].mxu0
        %v805 = vadd.f32 %v553, %v804
        %v806 = vpop.f32.mrb[0].mxu0
        %807 = vmatprep.mubr.f32.mxu0 %v423
        %808 = vmatmul.mubr.f32.gmra.mrb[0].mxu0 %v422
        %v809 = vpop.f32.mrb[0].mxu0
        %v810 = vadd.f32 %v553, %v809
        %v811 = vpop.f32.mrb[0].mxu0
        %812 = vmatprep.mubr.f32.mxu0 %v425
        %813 = vmatmul.mubr.f32.gmra.mrb[0].mxu0 %v424
        %v814 = vpop.f32.mrb[0].mxu0
        %v815 = vadd.f32 %v553, %v814
        %v816 = vpop.f32.mrb[0].mxu0
        %817 = vmatprep.mubr.f32.mxu0 %v427
        %818 = vmatmul.mubr.f32.gmra.mrb[0].mxu0 %v426
        %v819 = vpop.f32.mrb[0].mxu0
        %v820 = vadd.f32 %v553, %v819
        %v821 = vpop.f32.mrb[0].mxu0
        %822 = vmatprep.mubr.f32.mxu0 %v429
        %823 = vmatmul.mubr.f32.gmra.mrb[0].mxu0 %v428
        %v824 = vpop.f32.mrb[0].mxu0
        %v825 = vadd.f32 %v553, %v824
        %v826 = vpop.f32.mrb[0].mxu0
        %827 = vmatprep.mubr.f32.mxu0 %v431
        %828 = vmatmul.mubr.f32.gmra.mrb[0].mxu0 %v430
        %v829 = vpop.f32.mrb[0].mxu0
        %v830 = vadd.f32 %v553, %v829
        %v831 = vpop.f32.mrb[0].mxu0
        %832 = vmatprep.mubr.f32.mxu0 %v433
        %833 = vmatmul.mubr.f32.gmra.mrb[0].mxu0 %v432
        %v834 = vpop.f32.mrb[0].mxu0
        %v835 = vadd.f32 %v553, %v834
        %v836 = vpop.f32.mrb[0].mxu0
        %837 = vmatprep.mubr.f32.mxu0 %v435
        %838 = vmatmul.mubr.f32.gmra.mrb[0].mxu0 %v434
        %v839 = vpop.f32.mrb[0].mxu0
        %v840 = vadd.f32 %v553, %v839
        %v841 = vpop.f32.mrb[0].mxu0
        %842 = vmatprep.mubr.f32.mxu0 %v437
        %843 = vmatmul.mubr.f32.gmra.mrb[0].mxu0 %v436
        %v844 = vpop.f32.mrb[0].mxu0
        %v845 = vadd.f32 %v553, %v844
        %v846 = vpop.f32.mrb[0].mxu0
        %847 = vmatprep.mubr.f32.mxu0 %v439
        %848 = vmatmul.mubr.f32.gmra.mrb[0].mxu0 %v438
        %v849 = vpop.f32.mrb[0].mxu0
        %v850 = vadd.f32 %v553, %v849
        %v851 = vpop.f32.mrb[0].mxu0
        %852 = vmatprep.mubr.f32.mxu0 %v441
        %853 = vmatmul.mubr.f32.gmra.mrb[0].mxu0 %v440
        %v854 = vpop.f32.mrb[0].mxu0
        %v855 = vadd.f32 %v553, %v854
        %v856 = vpop.f32.mrb[0].mxu0
        %857 = vmatprep.mubr.f32.mxu0 %v443
        %858 = vmatmul.mubr.f32.gmra.mrb[0].mxu0 %v442
        %v859 = vpop.f32.mrb[0].mxu0
        %v860 = vadd.f32 %v553, %v859
        %v861 = vpop.f32.mrb[0].mxu0
        %862 = vdwg.mxu0
        %v863 = vmax.f32 %v624, 0.0
        %v864 = vmax.f32 %v626, 0.0
        %v865 = vmax.f32 %v785, 0.0
        %v866 = vmax.f32 %v630, 0.0
        %v867 = vmax.f32 %v632, 0.0
        %v868 = vmax.f32 %v790, 0.0
        %v869 = vmax.f32 %v636, 0.0
        %v870 = vmax.f32 %v638, 0.0
        %v871 = vmax.f32 %v795, 0.0
        %v872 = vmax.f32 %v642, 0.0
        %v873 = vmax.f32 %v644, 0.0
        %v874 = vmax.f32 %v800, 0.0
        %v875 = vmax.f32 %v648, 0.0
        %v876 = vmax.f32 %v650, 0.0
        %v877 = vmax.f32 %v805, 0.0
        %v878 = vmax.f32 %v654, 0.0
        %v879 = vmax.f32 %v656, 0.0
        %v880 = vmax.f32 %v810, 0.0
        %v881 = vmax.f32 %v660, 0.0
        %v882 = vmax.f32 %v662, 0.0
        %v883 = vmax.f32 %v815, 0.0
        %v884 = vmax.f32 %v666, 0.0
        %v885 = vmax.f32 %v668, 0.0
        %v886 = vmax.f32 %v820, 0.0
        %v887 = vmax.f32 %v672, 0.0
        %v888 = vmax.f32 %v674, 0.0
        %v889 = vmax.f32 %v825, 0.0
        %v890 = vmax.f32 %v678, 0.0
        %v891 = vmax.f32 %v680, 0.0
        %v892 = vmax.f32 %v830, 0.0
        %v893 = vmax.f32 %v684, 0.0
        %v894 = vmax.f32 %v686, 0.0
        %v895 = vmax.f32 %v835, 0.0
        %v896 = vmax.f32 %v690, 0.0
        %v897 = vmax.f32 %v692, 0.0
        %v898 = vmax.f32 %v840, 0.0
        %v899 = vmax.f32 %v696, 0.0
        %v900 = vmax.f32 %v698, 0.0
        %v901 = vmax.f32 %v845, 0.0
        %v902 = vmax.f32 %v702, 0.0
        %v903 = vmax.f32 %v704, 0.0
        %v904 = vmax.f32 %v850, 0.0
        %v905 = vmax.f32 %v708, 0.0
        %v906 = vmax.f32 %v710, 0.0
        %v907 = vmax.f32 %v855, 0.0
        %v908 = vmax.f32 %v714, 0.0
        %v909 = vmax.f32 %v716, 0.0
        %v910 = vmax.f32 %v860, 0.0
        %v911 = vld [vmem:[#allocation7] sm:$0xff]
        %v912 = vld [vmem:[#allocation7 + $0x8] sm:$0xff]
        %v913 = vld [vmem:[#allocation7 + $0x10] sm:$0xff]
        %v914 = vld [vmem:[#allocation7 + $0x18] sm:$0xff]
        %v915 = vld [vmem:[#allocation7 + $0x20] sm:$0xff]
        %v916 = vld [vmem:[#allocation7 + $0x28] sm:$0xff]
        %v917 = vld [vmem:[#allocation7 + $0x30] sm:$0xff]
        %v918 = vld [vmem:[#allocation7 + $0x38] sm:$0xff]
        %v919 = vld [vmem:[#allocation7 + $0x40] sm:$0xff]
        %v920 = vld [vmem:[#allocation7 + $0x48] sm:$0xff]
        %v921 = vld [vmem:[#allocation7 + $0x50] sm:$0xff]
        %v922 = vld [vmem:[#allocation7 + $0x58] sm:$0xff]
        %v923 = vld [vmem:[#allocation7 + $0x60] sm:$0xff]
        %v924 = vld [vmem:[#allocation7 + $0x68] sm:$0xff]
        %v925 = vld [vmem:[#allocation7 + $0x70] sm:$0xff]
        %v926 = vld [vmem:[#allocation7 + $0x78] sm:$0xff]
        %v927 = vld [vmem:[#allocation7 + $0x80] sm:$0xff]
        %v928 = vld [vmem:[#allocation7 + $0x88] sm:$0xff]
        %v929 = vld [vmem:[#allocation7 + $0x90] sm:$0xff]
        %v930 = vld [vmem:[#allocation7 + $0x98] sm:$0xff]
        %v931 = vld [vmem:[#allocation7 + $0xa0] sm:$0xff]
        %v932 = vld [vmem:[#allocation7 + $0xa8] sm:$0xff]
        %v933 = vld [vmem:[#allocation7 + $0xb0] sm:$0xff]
        %v934 = vld [vmem:[#allocation7 + $0xb8] sm:$0xff]
        %v935 = vld [vmem:[#allocation7 + $0xc0] sm:$0xff]
        %v936 = vld [vmem:[#allocation7 + $0xc8] sm:$0xff]
        %v937 = vld [vmem:[#allocation7 + $0xd0] sm:$0xff]
        %v938 = vld [vmem:[#allocation7 + $0xd8] sm:$0xff]
        %v939 = vld [vmem:[#allocation7 + $0xe0] sm:$0xff]
        %v940 = vld [vmem:[#allocation7 + $0xe8] sm:$0xff]
        %v941 = vld [vmem:[#allocation7 + $0xf0] sm:$0xff]
        %v942 = vld [vmem:[#allocation7 + $0xf8] sm:$0xff]
        %v943 = vld [vmem:[#allocation7 + $0x100] sm:$0xff]
        %v944 = vld [vmem:[#allocation7 + $0x108] sm:$0xff]
        %v945 = vld [vmem:[#allocation7 + $0x110] sm:$0xff]
        %v946 = vld [vmem:[#allocation7 + $0x118] sm:$0xff]
        %v947 = vld [vmem:[#allocation7 + $0x120] sm:$0xff]
        %v948 = vld [vmem:[#allocation7 + $0x128] sm:$0xff]
        %v949 = vld [vmem:[#allocation7 + $0x130] sm:$0xff]
        %v950 = vld [vmem:[#allocation7 + $0x138] sm:$0xff]
        %v951 = vld [vmem:[#allocation7 + $0x140] sm:$0xff]
        %v952 = vld [vmem:[#allocation7 + $0x148] sm:$0xff]
        %v953 = vld [vmem:[#allocation7 + $0x150] sm:$0xff]
        %v954 = vld [vmem:[#allocation7 + $0x158] sm:$0xff]
        %v955 = vld [vmem:[#allocation7 + $0x160] sm:$0xff]
        %v956 = vld [vmem:[#allocation7 + $0x168] sm:$0xff]
        %v957 = vld [vmem:[#allocation7 + $0x170] sm:$0xff]
        %v958 = vld [vmem:[#allocation7 + $0x178] sm:$0xff]
        %v959 = vld [vmem:[%s4] sm:$0x1]
        %v961 = vlaneseq
        %v962 = vshrl.u32 %v961, 7
        %v963 = vsub.s32 0, %v962
        %v964 = vrot.slane %v959, %v963
        %966 = vmatprep.subr.mxu0 0.0
        %967 = vmatpush1.msra.mxu0 %v911
        %968 = vmatprep.subr.mxu0 0.0
        %969 = vmatpush1.msra.mxu0 %v912
        %970 = vmatprep.subr.mxu0 0.0
        %971 = vmatpush1.msra.mxu0 %v913
        %972 = vmatprep.subr.mxu0 0.0
        %973 = vmatpush1.msra.mxu0 %v914
        %974 = vmatprep.subr.mxu0 0.0
        %975 = vmatpush1.msra.mxu0 %v915
        %976 = vmatprep.subr.mxu0 0.0
        %977 = vmatpush1.msra.mxu0 %v916
        %978 = vmatprep.subr.mxu0 0.0
        %979 = vmatpush1.msra.mxu0 %v917
        %980 = vmatprep.subr.mxu0 0.0
        %981 = vmatpush1.msra.mxu0 %v918
        %982 = vmatprep.subr.mxu0 0.0
        %983 = vmatpush1.msra.mxu0 %v919
        %984 = vmatprep.subr.mxu0 0.0
        %985 = vmatpush1.msra.mxu0 %v920
        %986 = vmatprep.subr.mxu0 0.0
        %987 = vmatpush1.msra.mxu0 %v921
        %988 = vmatprep.subr.mxu0 0.0
        %989 = vmatpush1.msra.mxu0 %v922
        %990 = vmatprep.subr.mxu0 0.0
        %991 = vmatpush1.msra.mxu0 %v923
        %992 = vmatprep.subr.mxu0 0.0
        %993 = vmatpush1.msra.mxu0 %v924
        %994 = vmatprep.subr.mxu0 0.0
        %995 = vmatpush1.msra.mxu0 %v925
        %996 = vmatprep.subr.mxu0 0.0
        %997 = vmatpush1.msra.mxu0 %v926
        %998 = vmatprep.subr.mxu0 0.0
        %999 = vmatpush1.msra.mxu0 %v927
        %1000 = vmatprep.subr.mxu0 0.0
        %1001 = vmatpush1.msra.mxu0 %v928
        %1002 = vmatprep.subr.mxu0 0.0
        %1003 = vmatpush1.msra.mxu0 %v929
        %1004 = vmatprep.subr.mxu0 0.0
        %1005 = vmatpush1.msra.mxu0 %v930
        %1006 = vmatprep.subr.mxu0 0.0
        %1007 = vmatpush1.msra.mxu0 %v931
        %1008 = vmatprep.subr.mxu0 0.0
        %1009 = vmatpush1.msra.mxu0 %v932
        %1010 = vmatprep.subr.mxu0 0.0
        %1011 = vmatpush1.msra.mxu0 %v933
        %1012 = vmatprep.subr.mxu0 0.0
        %1013 = vmatpush1.msra.mxu0 %v934
        %1014 = vmatprep.subr.mxu0 0.0
        %1015 = vmatpush1.msra.mxu0 %v935
        %1016 = vmatprep.subr.mxu0 0.0
        %1017 = vmatpush1.msra.mxu0 %v936
        %1018 = vmatprep.subr.mxu0 0.0
        %1019 = vmatpush1.msra.mxu0 %v937
        %1020 = vmatprep.subr.mxu0 0.0
        %1021 = vmatpush1.msra.mxu0 %v938
        %1022 = vmatprep.subr.mxu0 0.0
        %1023 = vmatpush1.msra.mxu0 %v939
        %1024 = vmatprep.subr.mxu0 0.0
        %1025 = vmatpush1.msra.mxu0 %v940
        %1026 = vmatprep.subr.mxu0 0.0
        %1027 = vmatpush1.msra.mxu0 %v941
        %1028 = vmatprep.subr.mxu0 0.0
        %1029 = vmatpush1.msra.mxu0 %v942
        %1030 = vmatprep.mubr.f32.mxu0 %v864
        %1031 = vmatmul.mubr.f32.gmra.mrb[0].mxu0 %v863
        %v1032 = vpop.f32.mrb[0].mxu0
        %v1033 = vadd.f32 %v964, %v1032
        %v1034 = vpop.f32.mrb[0].mxu0
        %1035 = vmatprep.mubr.f32.mxu0 %v867
        %1036 = vmatmul.mubr.f32.gmra.mrb[0].mxu0 %v866
        %v1037 = vpop.f32.mrb[0].mxu0
        %v1038 = vadd.f32 %v964, %v1037
        %v1039 = vpop.f32.mrb[0].mxu0
        %1040 = vmatprep.mubr.f32.mxu0 %v870
        %1041 = vmatmul.mubr.f32.gmra.mrb[0].mxu0 %v869
        %v1042 = vpop.f32.mrb[0].mxu0
        %v1043 = vadd.f32 %v964, %v1042
        %v1044 = vpop.f32.mrb[0].mxu0
        %1045 = vmatprep.mubr.f32.mxu0 %v873
        %1046 = vmatmul.mubr.f32.gmra.mrb[0].mxu0 %v872
        %v1047 = vpop.f32.mrb[0].mxu0
        %v1048 = vadd.f32 %v964, %v1047
        %v1049 = vpop.f32.mrb[0].mxu0
        %1050 = vmatprep.mubr.f32.mxu0 %v876
        %1051 = vmatmul.mubr.f32.gmra.mrb[0].mxu0 %v875
        %v1052 = vpop.f32.mrb[0].mxu0
        %v1053 = vadd.f32 %v964, %v1052
        %v1054 = vpop.f32.mrb[0].mxu0
        %1055 = vmatprep.mubr.f32.mxu0 %v879
        %1056 = vmatmul.mubr.f32.gmra.mrb[0].mxu0 %v878
        %v1057 = vpop.f32.mrb[0].mxu0
        %v1058 = vadd.f32 %v964, %v1057
        %v1059 = vpop.f32.mrb[0].mxu0
        %1060 = vmatprep.mubr.f32.mxu0 %v882
        %1061 = vmatmul.mubr.f32.gmra.mrb[0].mxu0 %v881
        %v1062 = vpop.f32.mrb[0].mxu0
        %v1063 = vadd.f32 %v964, %v1062
        %v1064 = vpop.f32.mrb[0].mxu0
        %1065 = vmatprep.mubr.f32.mxu0 %v885
        %1066 = vmatmul.mubr.f32.gmra.mrb[0].mxu0 %v884
        %v1067 = vpop.f32.mrb[0].mxu0
        %v1068 = vadd.f32 %v964, %v1067
        %v1069 = vpop.f32.mrb[0].mxu0
        %1070 = vmatprep.mubr.f32.mxu0 %v888
        %1071 = vmatmul.mubr.f32.gmra.mrb[0].mxu0 %v887
        %v1072 = vpop.f32.mrb[0].mxu0
        %v1073 = vadd.f32 %v964, %v1072
        %v1074 = vpop.f32.mrb[0].mxu0
        %1075 = vmatprep.mubr.f32.mxu0 %v891
        %1076 = vmatmul.mubr.f32.gmra.mrb[0].mxu0 %v890
        %v1077 = vpop.f32.mrb[0].mxu0
        %v1078 = vadd.f32 %v964, %v1077
        %v1079 = vpop.f32.mrb[0].mxu0
        %1080 = vmatprep.mubr.f32.mxu0 %v894
        %1081 = vmatmul.mubr.f32.gmra.mrb[0].mxu0 %v893
        %v1082 = vpop.f32.mrb[0].mxu0
        %v1083 = vadd.f32 %v964, %v1082
        %v1084 = vpop.f32.mrb[0].mxu0
        %1085 = vmatprep.mubr.f32.mxu0 %v897
        %1086 = vmatmul.mubr.f32.gmra.mrb[0].mxu0 %v896
        %v1087 = vpop.f32.mrb[0].mxu0
        %v1088 = vadd.f32 %v964, %v1087
        %v1089 = vpop.f32.mrb[0].mxu0
        %1090 = vmatprep.mubr.f32.mxu0 %v900
        %1091 = vmatmul.mubr.f32.gmra.mrb[0].mxu0 %v899
        %v1092 = vpop.f32.mrb[0].mxu0
        %v1093 = vadd.f32 %v964, %v1092
        %v1094 = vpop.f32.mrb[0].mxu0
        %1095 = vmatprep.mubr.f32.mxu0 %v903
        %1096 = vmatmul.mubr.f32.gmra.mrb[0].mxu0 %v902
        %v1097 = vpop.f32.mrb[0].mxu0
        %v1098 = vadd.f32 %v964, %v1097
        %v1099 = vpop.f32.mrb[0].mxu0
        %1100 = vmatprep.mubr.f32.mxu0 %v906
        %1101 = vmatmul.mubr.f32.gmra.mrb[0].mxu0 %v905
        %v1102 = vpop.f32.mrb[0].mxu0
        %v1103 = vadd.f32 %v964, %v1102
        %v1104 = vpop.f32.mrb[0].mxu0
        %1105 = vmatprep.mubr.f32.mxu0 %v909
        %1106 = vmatmul.mubr.f32.gmra.mrb[0].mxu0 %v908
        %v1107 = vpop.f32.mrb[0].mxu0
        %v1108 = vadd.f32 %v964, %v1107
        %v1109 = vpop.f32.mrb[0].mxu0
        %1110 = vdwg.mxu0
        %1111 = vmatprep.subr.mxu0 0.0
        %1112 = vmatpush1.msra.mxu0 %v943
        %1113 = vmatprep.subr.mxu0 0.0
        %1114 = vmatpush1.msra.mxu0 %v944
        %1115 = vmatprep.subr.mxu0 0.0
        %1116 = vmatpush1.msra.mxu0 %v945
        %1117 = vmatprep.subr.mxu0 0.0
        %1118 = vmatpush1.msra.mxu0 %v946
        %1119 = vmatprep.subr.mxu0 0.0
        %1120 = vmatpush1.msra.mxu0 %v947
        %1121 = vmatprep.subr.mxu0 0.0
        %1122 = vmatpush1.msra.mxu0 %v948
        %1123 = vmatprep.subr.mxu0 0.0
        %1124 = vmatpush1.msra.mxu0 %v949
        %1125 = vmatprep.subr.mxu0 0.0
        %1126 = vmatpush1.msra.mxu0 %v950
        %1127 = vmatprep.subr.mxu0 0.0
        %1128 = vmatpush1.msra.mxu0 %v951
        %1129 = vmatprep.subr.mxu0 0.0
        %1130 = vmatpush1.msra.mxu0 %v952
        %1131 = vmatprep.subr.mxu0 0.0
        %1132 = vmatpush1.msra.mxu0 %v953
        %1133 = vmatprep.subr.mxu0 0.0
        %1134 = vmatpush1.msra.mxu0 %v954
        %1135 = vmatprep.subr.mxu0 0.0
        %1136 = vmatpush1.msra.mxu0 %v955
        %1137 = vmatprep.subr.mxu0 0.0
        %1138 = vmatpush1.msra.mxu0 %v956
        %1139 = vmatprep.subr.mxu0 0.0
        %1140 = vmatpush1.msra.mxu0 %v957
        %1141 = vmatprep.subr.mxu0 0.0
        %1142 = vmatpush1.msra.mxu0 %v958
        %1143 = vmatprep.subr.mxu0 0.0
        %1144 = vmatpush1.msra.mxu0 0.0
        %1145 = vmatprep.subr.mxu0 0.0
        %1146 = vmatpush1.msra.mxu0 0.0
        %1147 = vmatprep.subr.mxu0 0.0
        %1148 = vmatpush1.msra.mxu0 0.0
        %1149 = vmatprep.subr.mxu0 0.0
        %1150 = vmatpush1.msra.mxu0 0.0
        %1151 = vmatprep.subr.mxu0 0.0
        %1152 = vmatpush1.msra.mxu0 0.0
        %1153 = vmatprep.subr.mxu0 0.0
        %1154 = vmatpush1.msra.mxu0 0.0
        %1155 = vmatprep.subr.mxu0 0.0
        %1156 = vmatpush1.msra.mxu0 0.0
        %1157 = vmatprep.subr.mxu0 0.0
        %1158 = vmatpush1.msra.mxu0 0.0
        %1159 = vmatprep.subr.mxu0 0.0
        %1160 = vmatpush1.msra.mxu0 0.0
        %1161 = vmatprep.subr.mxu0 0.0
        %1162 = vmatpush1.msra.mxu0 0.0
        %1163 = vmatprep.subr.mxu0 0.0
        %1164 = vmatpush1.msra.mxu0 0.0
        %1165 = vmatprep.subr.mxu0 0.0
        %1166 = vmatpush1.msra.mxu0 0.0
        %1167 = vmatprep.subr.mxu0 0.0
        %1168 = vmatpush1.msra.mxu0 0.0
        %1169 = vmatprep.subr.mxu0 0.0
        %1170 = vmatpush1.msra.mxu0 0.0
        %1171 = vmatprep.subr.mxu0 0.0
        %1172 = vmatpush1.msra.mxu0 0.0
        %1173 = vmatprep.subr.mxu0 0.0
        %1174 = vmatpush1.msra.mxu0 0.0
        %1175 = vmatprep.mubr.f32.mxu0 0.0
        %1176 = vmatmul.mubr.f32.gmra.mrb[0].mxu0 %v865
        %v1177 = vpop.f32.mrb[0].mxu0
        %v1178 = vadd.f32 %v1033, %v1177
        %v1179 = vpop.f32.mrb[0].mxu0
        %1180 = vmatprep.mubr.f32.mxu0 0.0
        %1181 = vmatmul.mubr.f32.gmra.mrb[0].mxu0 %v868
        %v1182 = vpop.f32.mrb[0].mxu0
        %v1183 = vadd.f32 %v1038, %v1182
        %v1184 = vpop.f32.mrb[0].mxu0
        %1185 = vmatprep.mubr.f32.mxu0 0.0
        %1186 = vmatmul.mubr.f32.gmra.mrb[0].mxu0 %v871
        %v1187 = vpop.f32.mrb[0].mxu0
        %v1188 = vadd.f32 %v1043, %v1187
        %v1189 = vpop.f32.mrb[0].mxu0
        %1190 = vmatprep.mubr.f32.mxu0 0.0
        %1191 = vmatmul.mubr.f32.gmra.mrb[0].mxu0 %v874
        %v1192 = vpop.f32.mrb[0].mxu0
        %v1193 = vadd.f32 %v1048, %v1192
        %v1194 = vpop.f32.mrb[0].mxu0
        %1195 = vmatprep.mubr.f32.mxu0 0.0
        %1196 = vmatmul.mubr.f32.gmra.mrb[0].mxu0 %v877
        %v1197 = vpop.f32.mrb[0].mxu0
        %v1198 = vadd.f32 %v1053, %v1197
        %v1199 = vpop.f32.mrb[0].mxu0
        %1200 = vmatprep.mubr.f32.mxu0 0.0
        %1201 = vmatmul.mubr.f32.gmra.mrb[0].mxu0 %v880
        %v1202 = vpop.f32.mrb[0].mxu0
        %v1203 = vadd.f32 %v1058, %v1202
        %v1204 = vpop.f32.mrb[0].mxu0
        %1205 = vmatprep.mubr.f32.mxu0 0.0
        %1206 = vmatmul.mubr.f32.gmra.mrb[0].mxu0 %v883
        %v1207 = vpop.f32.mrb[0].mxu0
        %v1208 = vadd.f32 %v1063, %v1207
        %v1209 = vpop.f32.mrb[0].mxu0
        %1210 = vmatprep.mubr.f32.mxu0 0.0
        %1211 = vmatmul.mubr.f32.gmra.mrb[0].mxu0 %v886
        %v1212 = vpop.f32.mrb[0].mxu0
        %v1213 = vadd.f32 %v1068, %v1212
        %v1214 = vpop.f32.mrb[0].mxu0
        %1215 = vmatprep.mubr.f32.mxu0 0.0
        %1216 = vmatmul.mubr.f32.gmra.mrb[0].mxu0 %v889
        %v1217 = vpop.f32.mrb[0].mxu0
        %v1218 = vadd.f32 %v1073, %v1217
        %v1219 = vpop.f32.mrb[0].mxu0
        %1220 = vmatprep.mubr.f32.mxu0 0.0
        %1221 = vmatmul.mubr.f32.gmra.mrb[0].mxu0 %v892
        %v1222 = vpop.f32.mrb[0].mxu0
        %v1223 = vadd.f32 %v1078, %v1222
        %v1224 = vpop.f32.mrb[0].mxu0
        %1225 = vmatprep.mubr.f32.mxu0 0.0
        %1226 = vmatmul.mubr.f32.gmra.mrb[0].mxu0 %v895
        %v1227 = vpop.f32.mrb[0].mxu0
        %v1228 = vadd.f32 %v1083, %v1227
        %v1229 = vpop.f32.mrb[0].mxu0
        %1230 = vmatprep.mubr.f32.mxu0 0.0
        %1231 = vmatmul.mubr.f32.gmra.mrb[0].mxu0 %v898
        %v1232 = vpop.f32.mrb[0].mxu0
        %v1233 = vadd.f32 %v1088, %v1232
        %v1234 = vpop.f32.mrb[0].mxu0
        %1235 = vmatprep.mubr.f32.mxu0 0.0
        %1236 = vmatmul.mubr.f32.gmra.mrb[0].mxu0 %v901
        %v1237 = vpop.f32.mrb[0].mxu0
        %v1238 = vadd.f32 %v1093, %v1237
        %v1239 = vpop.f32.mrb[0].mxu0
        %1240 = vmatprep.mubr.f32.mxu0 0.0
        %1241 = vmatmul.mubr.f32.gmra.mrb[0].mxu0 %v904
        %v1242 = vpop.f32.mrb[0].mxu0
        %v1243 = vadd.f32 %v1098, %v1242
        %v1244 = vpop.f32.mrb[0].mxu0
        %1245 = vmatprep.mubr.f32.mxu0 0.0
        %1246 = vmatmul.mubr.f32.gmra.mrb[0].mxu0 %v907
        %v1247 = vpop.f32.mrb[0].mxu0
        %v1248 = vadd.f32 %v1103, %v1247
        %v1249 = vpop.f32.mrb[0].mxu0
        %1250 = vmatprep.mubr.f32.mxu0 0.0
        %1251 = vmatmul.mubr.f32.gmra.mrb[0].mxu0 %v910
        %v1252 = vpop.f32.mrb[0].mxu0
        %v1253 = vadd.f32 %v1108, %v1252
        %v1254 = vpop.f32.mrb[0].mxu0
        %1255 = vdwg.mxu0
        %v1256 = vmax.f32 %v1178, 0.0
        %v1257 = vmax.f32 %v1183, 0.0
        %v1258 = vmax.f32 %v1188, 0.0
        %v1259 = vmax.f32 %v1193, 0.0
        %v1260 = vmax.f32 %v1198, 0.0
        %v1261 = vmax.f32 %v1203, 0.0
        %v1262 = vmax.f32 %v1208, 0.0
        %v1263 = vmax.f32 %v1213, 0.0
        %v1264 = vmax.f32 %v1218, 0.0
        %v1265 = vmax.f32 %v1223, 0.0
        %v1266 = vmax.f32 %v1228, 0.0
        %v1267 = vmax.f32 %v1233, 0.0
        %v1268 = vmax.f32 %v1238, 0.0
        %v1269 = vmax.f32 %v1243, 0.0
        %v1270 = vmax.f32 %v1248, 0.0
        %v1271 = vmax.f32 %v1253, 0.0
        %v1272 = vld [vmem:[#allocation8] sm:$0xff]
        %v1273 = vld [vmem:[#allocation8 + $0x8] sm:$0xff]
        %v1274 = vld [vmem:[#allocation8 + $0x10] sm:$0xff]
        %v1275 = vld [vmem:[#allocation8 + $0x18] sm:$0xff]
        %v1276 = vld [vmem:[#allocation8 + $0x20] sm:$0xff]
        %v1277 = vld [vmem:[#allocation8 + $0x28] sm:$0xff]
        %v1278 = vld [vmem:[#allocation8 + $0x30] sm:$0xff]
        %v1279 = vld [vmem:[#allocation8 + $0x38] sm:$0xff]
        %v1280 = vld [vmem:[#allocation8 + $0x40] sm:$0xff]
        %v1281 = vld [vmem:[#allocation8 + $0x48] sm:$0xff]
        %v1282 = vld [vmem:[#allocation8 + $0x50] sm:$0xff]
        %v1283 = vld [vmem:[#allocation8 + $0x58] sm:$0xff]
        %v1284 = vld [vmem:[#allocation8 + $0x60] sm:$0xff]
        %v1285 = vld [vmem:[#allocation8 + $0x68] sm:$0xff]
        %v1286 = vld [vmem:[#allocation8 + $0x70] sm:$0xff]
        %v1287 = vld [vmem:[#allocation8 + $0x78] sm:$0xff]
        %v1288 = vld [vmem:[%s6] sm:$0x1]
        %v1290 = vlaneseq
        %v1291 = vshrl.u32 %v1290, 7
        %v1292 = vsub.s32 0, %v1291
        %v1293 = vrot.slane %v1288, %v1292
        %1295 = vmatprep.subr.mxu0 0.0
        %1296 = vmatpush1.msra.mxu0 %v1272
        %1297 = vmatprep.subr.mxu0 0.0
        %1298 = vmatpush1.msra.mxu0 %v1273
        %1299 = vmatprep.subr.mxu0 0.0
        %1300 = vmatpush1.msra.mxu0 %v1274
        %1301 = vmatprep.subr.mxu0 0.0
        %1302 = vmatpush1.msra.mxu0 %v1275
        %1303 = vmatprep.subr.mxu0 0.0
        %1304 = vmatpush1.msra.mxu0 %v1276
        %1305 = vmatprep.subr.mxu0 0.0
        %1306 = vmatpush1.msra.mxu0 %v1277
        %1307 = vmatprep.subr.mxu0 0.0
        %1308 = vmatpush1.msra.mxu0 %v1278
        %1309 = vmatprep.subr.mxu0 0.0
        %1310 = vmatpush1.msra.mxu0 %v1279
        %1311 = vmatprep.subr.mxu0 0.0
        %1312 = vmatpush1.msra.mxu0 %v1280
        %1313 = vmatprep.subr.mxu0 0.0
        %1314 = vmatpush1.msra.mxu0 %v1281
        %1315 = vmatprep.subr.mxu0 0.0
        %1316 = vmatpush1.msra.mxu0 %v1282
        %1317 = vmatprep.subr.mxu0 0.0
        %1318 = vmatpush1.msra.mxu0 %v1283
        %1319 = vmatprep.subr.mxu0 0.0
        %1320 = vmatpush1.msra.mxu0 %v1284
        %1321 = vmatprep.subr.mxu0 0.0
        %1322 = vmatpush1.msra.mxu0 %v1285
        %1323 = vmatprep.subr.mxu0 0.0
        %1324 = vmatpush1.msra.mxu0 %v1286
        %1325 = vmatprep.subr.mxu0 0.0
        %1326 = vmatpush1.msra.mxu0 %v1287
        %1327 = vmatprep.subr.mxu0 0.0
        %1328 = vmatpush1.msra.mxu0 0.0
        %1329 = vmatprep.subr.mxu0 0.0
        %1330 = vmatpush1.msra.mxu0 0.0
        %1331 = vmatprep.subr.mxu0 0.0
        %1332 = vmatpush1.msra.mxu0 0.0
        %1333 = vmatprep.subr.mxu0 0.0
        %1334 = vmatpush1.msra.mxu0 0.0
        %1335 = vmatprep.subr.mxu0 0.0
        %1336 = vmatpush1.msra.mxu0 0.0
        %1337 = vmatprep.subr.mxu0 0.0
        %1338 = vmatpush1.msra.mxu0 0.0
        %1339 = vmatprep.subr.mxu0 0.0
        %1340 = vmatpush1.msra.mxu0 0.0
        %1341 = vmatprep.subr.mxu0 0.0
        %1342 = vmatpush1.msra.mxu0 0.0
        %1343 = vmatprep.subr.mxu0 0.0
        %1344 = vmatpush1.msra.mxu0 0.0
        %1345 = vmatprep.subr.mxu0 0.0
        %1346 = vmatpush1.msra.mxu0 0.0
        %1347 = vmatprep.subr.mxu0 0.0
        %1348 = vmatpush1.msra.mxu0 0.0
        %1349 = vmatprep.subr.mxu0 0.0
        %1350 = vmatpush1.msra.mxu0 0.0
        %1351 = vmatprep.subr.mxu0 0.0
        %1352 = vmatpush1.msra.mxu0 0.0
        %1353 = vmatprep.subr.mxu0 0.0
        %1354 = vmatpush1.msra.mxu0 0.0
        %1355 = vmatprep.subr.mxu0 0.0
        %1356 = vmatpush1.msra.mxu0 0.0
        %1357 = vmatprep.subr.mxu0 0.0
        %1358 = vmatpush1.msra.mxu0 0.0
        %1359 = vmatprep.mubr.f32.mxu0 0.0
        %1360 = vmatmul.mubr.f32.gmra.mrb[0].mxu0 %v1256
        %v1361 = vpop.f32.mrb[0].mxu0
        %v1362 = vadd.f32 %v1293, %v1361
        %v1363 = vpop.f32.mrb[0].mxu0
        %1364 = vmatprep.mubr.f32.mxu0 0.0
        %1365 = vmatmul.mubr.f32.gmra.mrb[0].mxu0 %v1257
        %v1366 = vpop.f32.mrb[0].mxu0
        %v1367 = vadd.f32 %v1293, %v1366
        %v1368 = vpop.f32.mrb[0].mxu0
        %1369 = vmatprep.mubr.f32.mxu0 0.0
        %1370 = vmatmul.mubr.f32.gmra.mrb[0].mxu0 %v1258
        %v1371 = vpop.f32.mrb[0].mxu0
        %v1372 = vadd.f32 %v1293, %v1371
        %v1373 = vpop.f32.mrb[0].mxu0
        %1374 = vmatprep.mubr.f32.mxu0 0.0
        %1375 = vmatmul.mubr.f32.gmra.mrb[0].mxu0 %v1259
        %v1376 = vpop.f32.mrb[0].mxu0
        %v1377 = vadd.f32 %v1293, %v1376
        %v1378 = vpop.f32.mrb[0].mxu0
        %1379 = vmatprep.mubr.f32.mxu0 0.0
        %1380 = vmatmul.mubr.f32.gmra.mrb[0].mxu0 %v1260
        %v1381 = vpop.f32.mrb[0].mxu0
        %v1382 = vadd.f32 %v1293, %v1381
        %v1383 = vpop.f32.mrb[0].mxu0
        %1384 = vmatprep.mubr.f32.mxu0 0.0
        %1385 = vmatmul.mubr.f32.gmra.mrb[0].mxu0 %v1261
        %v1386 = vpop.f32.mrb[0].mxu0
        %v1387 = vadd.f32 %v1293, %v1386
        %v1388 = vpop.f32.mrb[0].mxu0
        %1389 = vmatprep.mubr.f32.mxu0 0.0
        %1390 = vmatmul.mubr.f32.gmra.mrb[0].mxu0 %v1262
        %v1391 = vpop.f32.mrb[0].mxu0
        %v1392 = vadd.f32 %v1293, %v1391
        %v1393 = vpop.f32.mrb[0].mxu0
        %1394 = vmatprep.mubr.f32.mxu0 0.0
        %1395 = vmatmul.mubr.f32.gmra.mrb[0].mxu0 %v1263
        %v1396 = vpop.f32.mrb[0].mxu0
        %v1397 = vadd.f32 %v1293, %v1396
        %v1398 = vpop.f32.mrb[0].mxu0
        %1399 = vmatprep.mubr.f32.mxu0 0.0
        %1400 = vmatmul.mubr.f32.gmra.mrb[0].mxu0 %v1264
        %v1401 = vpop.f32.mrb[0].mxu0
        %v1402 = vadd.f32 %v1293, %v1401
        %v1403 = vpop.f32.mrb[0].mxu0
        %1404 = vmatprep.mubr.f32.mxu0 0.0
        %1405 = vmatmul.mubr.f32.gmra.mrb[0].mxu0 %v1265
        %v1406 = vpop.f32.mrb[0].mxu0
        %v1407 = vadd.f32 %v1293, %v1406
        %v1408 = vpop.f32.mrb[0].mxu0
        %1409 = vmatprep.mubr.f32.mxu0 0.0
        %1410 = vmatmul.mubr.f32.gmra.mrb[0].mxu0 %v1266
        %v1411 = vpop.f32.mrb[0].mxu0
        %v1412 = vadd.f32 %v1293, %v1411
        %v1413 = vpop.f32.mrb[0].mxu0
        %1414 = vmatprep.mubr.f32.mxu0 0.0
        %1415 = vmatmul.mubr.f32.gmra.mrb[0].mxu0 %v1267
        %v1416 = vpop.f32.mrb[0].mxu0
        %v1417 = vadd.f32 %v1293, %v1416
        %v1418 = vpop.f32.mrb[0].mxu0
        %1419 = vmatprep.mubr.f32.mxu0 0.0
        %1420 = vmatmul.mubr.f32.gmra.mrb[0].mxu0 %v1268
        %v1421 = vpop.f32.mrb[0].mxu0
        %v1422 = vadd.f32 %v1293, %v1421
        %v1423 = vpop.f32.mrb[0].mxu0
        %1424 = vmatprep.mubr.f32.mxu0 0.0
        %1425 = vmatmul.mubr.f32.gmra.mrb[0].mxu0 %v1269
        %v1426 = vpop.f32.mrb[0].mxu0
        %v1427 = vadd.f32 %v1293, %v1426
        %v1428 = vpop.f32.mrb[0].mxu0
        %1429 = vmatprep.mubr.f32.mxu0 0.0
        %1430 = vmatmul.mubr.f32.gmra.mrb[0].mxu0 %v1270
        %v1431 = vpop.f32.mrb[0].mxu0
        %v1432 = vadd.f32 %v1293, %v1431
        %v1433 = vpop.f32.mrb[0].mxu0
        %1434 = vmatprep.mubr.f32.mxu0 0.0
        %1435 = vmatmul.mubr.f32.gmra.mrb[0].mxu0 %v1271
        %v1436 = vpop.f32.mrb[0].mxu0
        %v1437 = vadd.f32 %v1293, %v1436
        %v1438 = vpop.f32.mrb[0].mxu0
        %1439 = vdwg.mxu0
        %v1440 = vmax.f32 %v1362, 0.0
        %v1441 = vmax.f32 %v1367, 0.0
        %v1442 = vmax.f32 %v1372, 0.0
        %v1443 = vmax.f32 %v1377, 0.0
        %v1444 = vmax.f32 %v1382, 0.0
        %v1445 = vmax.f32 %v1387, 0.0
        %v1446 = vmax.f32 %v1392, 0.0
        %v1447 = vmax.f32 %v1397, 0.0
        %v1448 = vmax.f32 %v1402, 0.0
        %v1449 = vmax.f32 %v1407, 0.0
        %v1450 = vmax.f32 %v1412, 0.0
        %v1451 = vmax.f32 %v1417, 0.0
        %v1452 = vmax.f32 %v1422, 0.0
        %v1453 = vmax.f32 %v1427, 0.0
        %v1454 = vmax.f32 %v1432, 0.0
        %v1455 = vmax.f32 %v1437, 0.0
        %v1456 = vld [vmem:[#allocation10] sm:$0xff]
        %v1457 = vld [vmem:[#allocation10 + $0x8] sm:$0xff]
        %v1458 = vld [vmem:[#allocation10 + $0x10] sm:$0xff]
        %v1459 = vld [vmem:[#allocation10 + $0x18] sm:$0xff]
        %v1460 = vld [vmem:[#allocation10 + $0x20] sm:$0xff]
        %v1461 = vld [vmem:[#allocation10 + $0x28] sm:$0xff]
        %v1462 = vld [vmem:[#allocation10 + $0x30] sm:$0xff]
        %v1463 = vld [vmem:[#allocation10 + $0x38] sm:$0xff]
        %v1464 = vld [vmem:[#allocation10 + $0x40] sm:$0xff]
        %v1465 = vld [vmem:[#allocation10 + $0x48] sm:$0xff]
        %v1466 = vld [vmem:[#allocation10 + $0x50] sm:$0xff]
        %v1467 = vld [vmem:[#allocation10 + $0x58] sm:$0xff]
        %v1468 = vld [vmem:[#allocation10 + $0x60] sm:$0xff]
        %v1469 = vld [vmem:[#allocation10 + $0x68] sm:$0xff]
        %v1470 = vld [vmem:[#allocation10 + $0x70] sm:$0xff]
        %v1471 = vld [vmem:[#allocation10 + $0x78] sm:$0xff]
        %v1472 = vld [vmem:[%s8] sm:$0x1]
        %v1474 = vlaneseq
        %v1475 = vshrl.u32 %v1474, 7
        %v1476 = vsub.s32 0, %v1475
        %v1477 = vrot.slane %v1472, %v1476
        %1479 = vmatprep.subr.mxu0 0.0
        %1480 = vmatpush1.msra.mxu0 %v1456
        %1481 = vmatprep.subr.mxu0 0.0
        %1482 = vmatpush1.msra.mxu0 %v1457
        %1483 = vmatprep.subr.mxu0 0.0
        %1484 = vmatpush1.msra.mxu0 %v1458
        %1485 = vmatprep.subr.mxu0 0.0
        %1486 = vmatpush1.msra.mxu0 %v1459
        %1487 = vmatprep.subr.mxu0 0.0
        %1488 = vmatpush1.msra.mxu0 %v1460
        %1489 = vmatprep.subr.mxu0 0.0
        %1490 = vmatpush1.msra.mxu0 %v1461
        %1491 = vmatprep.subr.mxu0 0.0
        %1492 = vmatpush1.msra.mxu0 %v1462
        %1493 = vmatprep.subr.mxu0 0.0
        %1494 = vmatpush1.msra.mxu0 %v1463
        %1495 = vmatprep.subr.mxu0 0.0
        %1496 = vmatpush1.msra.mxu0 %v1464
        %1497 = vmatprep.subr.mxu0 0.0
        %1498 = vmatpush1.msra.mxu0 %v1465
        %1499 = vmatprep.subr.mxu0 0.0
        %1500 = vmatpush1.msra.mxu0 %v1466
        %1501 = vmatprep.subr.mxu0 0.0
        %1502 = vmatpush1.msra.mxu0 %v1467
        %1503 = vmatprep.subr.mxu0 0.0
        %1504 = vmatpush1.msra.mxu0 %v1468
        %1505 = vmatprep.subr.mxu0 0.0
        %1506 = vmatpush1.msra.mxu0 %v1469
        %1507 = vmatprep.subr.mxu0 0.0
        %1508 = vmatpush1.msra.mxu0 %v1470
        %1509 = vmatprep.subr.mxu0 0.0
        %1510 = vmatpush1.msra.mxu0 %v1471
        %1511 = vmatprep.subr.mxu0 0.0
        %1512 = vmatpush1.msra.mxu0 0.0
        %1513 = vmatprep.subr.mxu0 0.0
        %1514 = vmatpush1.msra.mxu0 0.0
        %1515 = vmatprep.subr.mxu0 0.0
        %1516 = vmatpush1.msra.mxu0 0.0
        %1517 = vmatprep.subr.mxu0 0.0
        %1518 = vmatpush1.msra.mxu0 0.0
        %1519 = vmatprep.subr.mxu0 0.0
        %1520 = vmatpush1.msra.mxu0 0.0
        %1521 = vmatprep.subr.mxu0 0.0
        %1522 = vmatpush1.msra.mxu0 0.0
        %1523 = vmatprep.subr.mxu0 0.0
        %1524 = vmatpush1.msra.mxu0 0.0
        %1525 = vmatprep.subr.mxu0 0.0
        %1526 = vmatpush1.msra.mxu0 0.0
        %1527 = vmatprep.subr.mxu0 0.0
        %1528 = vmatpush1.msra.mxu0 0.0
        %1529 = vmatprep.subr.mxu0 0.0
        %1530 = vmatpush1.msra.mxu0 0.0
        %1531 = vmatprep.subr.mxu0 0.0
        %1532 = vmatpush1.msra.mxu0 0.0
        %1533 = vmatprep.subr.mxu0 0.0
        %1534 = vmatpush1.msra.mxu0 0.0
        %1535 = vmatprep.subr.mxu0 0.0
        %1536 = vmatpush1.msra.mxu0 0.0
        %1537 = vmatprep.subr.mxu0 0.0
        %1538 = vmatpush1.msra.mxu0 0.0
        %1539 = vmatprep.subr.mxu0 0.0
        %1540 = vmatpush1.msra.mxu0 0.0
        %1541 = vmatprep.subr.mxu0 0.0
        %1542 = vmatpush1.msra.mxu0 0.0
        %1543 = vmatprep.mubr.f32.mxu0 0.0
        %1544 = vmatmul.mubr.f32.gmra.mrb[0].mxu0 %v1440
        %v1545 = vpop.f32.mrb[0].mxu0
        %v1546 = vadd.f32 %v1477, %v1545
        %v1547 = vpop.f32.mrb[0].mxu0
        %1548 = vmatprep.mubr.f32.mxu0 0.0
        %1549 = vmatmul.mubr.f32.gmra.mrb[0].mxu0 %v1441
        %v1550 = vpop.f32.mrb[0].mxu0
        %v1551 = vadd.f32 %v1477, %v1550
        %v1552 = vpop.f32.mrb[0].mxu0
        %1553 = vmatprep.mubr.f32.mxu0 0.0
        %1554 = vmatmul.mubr.f32.gmra.mrb[0].mxu0 %v1442
        %v1555 = vpop.f32.mrb[0].mxu0
        %v1556 = vadd.f32 %v1477, %v1555
        %v1557 = vpop.f32.mrb[0].mxu0
        %1558 = vmatprep.mubr.f32.mxu0 0.0
        %1559 = vmatmul.mubr.f32.gmra.mrb[0].mxu0 %v1443
        %v1560 = vpop.f32.mrb[0].mxu0
        %v1561 = vadd.f32 %v1477, %v1560
        %v1562 = vpop.f32.mrb[0].mxu0
        %1563 = vmatprep.mubr.f32.mxu0 0.0
        %1564 = vmatmul.mubr.f32.gmra.mrb[0].mxu0 %v1444
        %v1565 = vpop.f32.mrb[0].mxu0
        %v1566 = vadd.f32 %v1477, %v1565
        %v1567 = vpop.f32.mrb[0].mxu0
        %1568 = vmatprep.mubr.f32.mxu0 0.0
        %1569 = vmatmul.mubr.f32.gmra.mrb[0].mxu0 %v1445
        %v1570 = vpop.f32.mrb[0].mxu0
        %v1571 = vadd.f32 %v1477, %v1570
        %v1572 = vpop.f32.mrb[0].mxu0
        %1573 = vmatprep.mubr.f32.mxu0 0.0
        %1574 = vmatmul.mubr.f32.gmra.mrb[0].mxu0 %v1446
        %v1575 = vpop.f32.mrb[0].mxu0
        %v1576 = vadd.f32 %v1477, %v1575
        %v1577 = vpop.f32.mrb[0].mxu0
        %1578 = vmatprep.mubr.f32.mxu0 0.0
        %1579 = vmatmul.mubr.f32.gmra.mrb[0].mxu0 %v1447
        %v1580 = vpop.f32.mrb[0].mxu0
        %v1581 = vadd.f32 %v1477, %v1580
        %v1582 = vpop.f32.mrb[0].mxu0
        %1583 = vmatprep.mubr.f32.mxu0 0.0
        %1584 = vmatmul.mubr.f32.gmra.mrb[0].mxu0 %v1448
        %v1585 = vpop.f32.mrb[0].mxu0
        %v1586 = vadd.f32 %v1477, %v1585
        %v1587 = vpop.f32.mrb[0].mxu0
        %1588 = vmatprep.mubr.f32.mxu0 0.0
        %1589 = vmatmul.mubr.f32.gmra.mrb[0].mxu0 %v1449
        %v1590 = vpop.f32.mrb[0].mxu0
        %v1591 = vadd.f32 %v1477, %v1590
        %v1592 = vpop.f32.mrb[0].mxu0
        %1593 = vmatprep.mubr.f32.mxu0 0.0
        %1594 = vmatmul.mubr.f32.gmra.mrb[0].mxu0 %v1450
        %v1595 = vpop.f32.mrb[0].mxu0
        %v1596 = vadd.f32 %v1477, %v1595
        %v1597 = vpop.f32.mrb[0].mxu0
        %1598 = vmatprep.mubr.f32.mxu0 0.0
        %1599 = vmatmul.mubr.f32.gmra.mrb[0].mxu0 %v1451
        %v1600 = vpop.f32.mrb[0].mxu0
        %v1601 = vadd.f32 %v1477, %v1600
        %v1602 = vpop.f32.mrb[0].mxu0
        %1603 = vmatprep.mubr.f32.mxu0 0.0
        %1604 = vmatmul.mubr.f32.gmra.mrb[0].mxu0 %v1452
        %v1605 = vpop.f32.mrb[0].mxu0
        %v1606 = vadd.f32 %v1477, %v1605
        %v1607 = vpop.f32.mrb[0].mxu0
        %1608 = vmatprep.mubr.f32.mxu0 0.0
        %1609 = vmatmul.mubr.f32.gmra.mrb[0].mxu0 %v1453
        %v1610 = vpop.f32.mrb[0].mxu0
        %v1611 = vadd.f32 %v1477, %v1610
        %v1612 = vpop.f32.mrb[0].mxu0
        %1613 = vmatprep.mubr.f32.mxu0 0.0
        %1614 = vmatmul.mubr.f32.gmra.mrb[0].mxu0 %v1454
        %v1615 = vpop.f32.mrb[0].mxu0
        %v1616 = vadd.f32 %v1477, %v1615
        %v1617 = vpop.f32.mrb[0].mxu0
        %1618 = vmatprep.mubr.f32.mxu0 0.0
        %1619 = vmatmul.mubr.f32.gmra.mrb[0].mxu0 %v1455
        %v1620 = vpop.f32.mrb[0].mxu0
        %v1621 = vadd.f32 %v1477, %v1620
        %v1622 = vpop.f32.mrb[0].mxu0
        %1623 = vdwg.mxu0
        %v1624 = vxor.u32 %v1546, 2147483648
        %v1625 = vxor.u32 %v1551, 2147483648
        %v1626 = vxor.u32 %v1556, 2147483648
        %v1627 = vxor.u32 %v1561, 2147483648
        %v1628 = vxor.u32 %v1566, 2147483648
        %v1629 = vxor.u32 %v1571, 2147483648
        %v1630 = vxor.u32 %v1576, 2147483648
        %v1631 = vxor.u32 %v1581, 2147483648
        %v1632 = vxor.u32 %v1586, 2147483648
        %v1633 = vxor.u32 %v1591, 2147483648
        %v1634 = vxor.u32 %v1596, 2147483648
        %v1635 = vxor.u32 %v1601, 2147483648
        %v1636 = vxor.u32 %v1606, 2147483648
        %v1637 = vxor.u32 %v1611, 2147483648
        %v1638 = vxor.u32 %v1616, 2147483648
        %v1639 = vxor.u32 %v1621, 2147483648
        %v1640 = vmul.f32 %v1624, 1.442695
        %v1641 = vpow.pop %v1640
        %v1642 = vmul.f32 %v1625, 1.442695
        %v1643 = vpow.pop %v1642
        %v1644 = vmul.f32 %v1626, 1.442695
        %v1645 = vpow.pop %v1644
        %v1646 = vmul.f32 %v1627, 1.442695
        %v1647 = vpow.pop %v1646
        %v1648 = vmul.f32 %v1628, 1.442695
        %v1649 = vpow.pop %v1648
        %v1650 = vmul.f32 %v1629, 1.442695
        %v1651 = vpow.pop %v1650
        %v1652 = vmul.f32 %v1630, 1.442695
        %v1653 = vpow.pop %v1652
        %v1654 = vmul.f32 %v1631, 1.442695
        %v1655 = vpow.pop %v1654
        %v1656 = vmul.f32 %v1632, 1.442695
        %v1657 = vpow.pop %v1656
        %v1658 = vmul.f32 %v1633, 1.442695
        %v1659 = vpow.pop %v1658
        %v1660 = vmul.f32 %v1634, 1.442695
        %v1661 = vpow.pop %v1660
        %v1662 = vmul.f32 %v1635, 1.442695
        %v1663 = vpow.pop %v1662
        %v1664 = vmul.f32 %v1636, 1.442695
        %v1665 = vpow.pop %v1664
        %v1666 = vmul.f32 %v1637, 1.442695
        %v1667 = vpow.pop %v1666
        %v1668 = vmul.f32 %v1638, 1.442695
        %v1669 = vpow.pop %v1668
        %v1670 = vmul.f32 %v1639, 1.442695
        %v1671 = vpow.pop %v1670
        %v1672 = vadd.f32 %v1641, 1.0
        %v1673 = vadd.f32 %v1643, 1.0
        %v1674 = vadd.f32 %v1645, 1.0
        %v1675 = vadd.f32 %v1647, 1.0
        %v1676 = vadd.f32 %v1649, 1.0
        %v1677 = vadd.f32 %v1651, 1.0
        %v1678 = vadd.f32 %v1653, 1.0
        %v1679 = vadd.f32 %v1655, 1.0
        %v1680 = vadd.f32 %v1657, 1.0
        %v1681 = vadd.f32 %v1659, 1.0
        %v1682 = vadd.f32 %v1661, 1.0
        %v1683 = vadd.f32 %v1663, 1.0
        %v1684 = vadd.f32 %v1665, 1.0
        %v1685 = vadd.f32 %v1667, 1.0
        %v1686 = vadd.f32 %v1669, 1.0
        %v1687 = vadd.f32 %v1671, 1.0
        %v1688 = vrcp.pop %v1672
        %v1689 = vmul.f32 1.0, %v1688
        %v1690 = vrcp.pop %v1673
        %v1691 = vmul.f32 1.0, %v1690
        %v1692 = vrcp.pop %v1674
        %v1693 = vmul.f32 1.0, %v1692
        %v1694 = vrcp.pop %v1675
        %v1695 = vmul.f32 1.0, %v1694
        %v1696 = vrcp.pop %v1676
        %v1697 = vmul.f32 1.0, %v1696
        %v1698 = vrcp.pop %v1677
        %v1699 = vmul.f32 1.0, %v1698
        %v1700 = vrcp.pop %v1678
        %v1701 = vmul.f32 1.0, %v1700
        %v1702 = vrcp.pop %v1679
        %v1703 = vmul.f32 1.0, %v1702
        %v1704 = vrcp.pop %v1680
        %v1705 = vmul.f32 1.0, %v1704
        %v1706 = vrcp.pop %v1681
        %v1707 = vmul.f32 1.0, %v1706
        %v1708 = vrcp.pop %v1682
        %v1709 = vmul.f32 1.0, %v1708
        %v1710 = vrcp.pop %v1683
        %v1711 = vmul.f32 1.0, %v1710
        %v1712 = vrcp.pop %v1684
        %v1713 = vmul.f32 1.0, %v1712
        %v1714 = vrcp.pop %v1685
        %v1715 = vmul.f32 1.0, %v1714
        %v1716 = vrcp.pop %v1686
        %v1717 = vmul.f32 1.0, %v1716
        %v1718 = vrcp.pop %v1687
        %v1719 = vmul.f32 1.0, %v1718
        %1720 = vst [vmem:[%s409] sm:$0xff] %v1689
        %1721 = vst [vmem:[%s409 + $0x8] sm:$0xff] %v1691
        %1722 = vst [vmem:[%s409 + $0x10] sm:$0xff] %v1693
        %1723 = vst [vmem:[%s409 + $0x18] sm:$0xff] %v1695
        %1724 = vst [vmem:[%s409 + $0x20] sm:$0xff] %v1697
        %1725 = vst [vmem:[%s409 + $0x28] sm:$0xff] %v1699
        %1726 = vst [vmem:[%s409 + $0x30] sm:$0xff] %v1701
        %1727 = vst [vmem:[%s409 + $0x38] sm:$0xff] %v1703
        %1728 = vst [vmem:[%s409 + $0x40] sm:$0xff] %v1705
        %1729 = vst [vmem:[%s409 + $0x48] sm:$0xff] %v1707
        %1730 = vst [vmem:[%s409 + $0x50] sm:$0xff] %v1709
        %1731 = vst [vmem:[%s409 + $0x58] sm:$0xff] %v1711
        %1732 = vst [vmem:[%s409 + $0x60] sm:$0xff] %v1713
        %1733 = vst [vmem:[%s409 + $0x68] sm:$0xff] %v1715
        %1734 = vst [vmem:[%s409 + $0x70] sm:$0xff] %v1717
        %1735 = vst [vmem:[%s409 + $0x78] sm:$0xff] %v1719
        %s1736 = sand.u32 %s230, 1
        %s1737 = scalar_lea.sflag [#allocation4], %s1736
        %s1738 = sand.u32 %s230, 1
        %s1739 = smul.addr %s1738, 128
        %s1740 = scalar_lea.vmem [#allocation11], %s1739
        // Predicated region
        $region77: #{tpu_custom_call.1} parent=55 // pred_check
          %p1741 = pneg %p240
        $region78: #{tpu_custom_call.1} parent=55 // pred_check_branch
          %1743 = sbr.rel (%p1741) target = $region80
        $region79: #{tpu_custom_call.1} parent=55 // pred_region
          %s1744 = smul.u32 16, %s28
          %s1746 = ssub.s32 2048, 2048
          %1747 = vsyncadd %s1737, %s1746
          %s1748 = smul.addr %s1744, 128
          %s1749 = scalar_lea.hbm %s9, %s1748
          %s1750 = sshll.u32 %s1740, 4
          %s1751 = int_to_ptr.vmem [resolvable:$true] %s1750
          %1756 = dma.vmem_to_hbm [thread:$0]  %s1751, 2048, %s1749, %s1737, 128, 128, 8
        $region80: #{tpu_custom_call.1} parent=55 // pred_fallthru
          _
      $region56: #{tpu_custom_call.1} parent=5 // pred_fallthru
        _
      %p1757 = scmp.le.s32.totalorder 2, %s23
      // Predicated region
      $region81: #{tpu_custom_call.1} parent=5 // pred_check
        %p1758 = pneg %p1757
      $region82: #{tpu_custom_call.1} parent=5 // pred_check_branch
        %1760 = sbr.rel (%p1758) target = $region84
      $region83: #{tpu_custom_call.1} parent=5 // pred_region
        %s1761 = ssub.s32 %s23, 2
        // Predicated region
        $region85: #{tpu_custom_call.1} parent=83 // pred_check
          %p1762 = pneg %p246
        $region86: #{tpu_custom_call.1} parent=83 // pred_check_branch
          %1764 = sbr.rel (%p1762) target = $region88
        $region87: #{tpu_custom_call.1} parent=83 // pred_region
          %s1765 = sand.u32 %s231, 1
          %s1766 = scalar_lea.sflag [#allocation4], %s1765
          %s1767 = sand.u32 %s231, 1
          %s1768 = smul.addr %s1767, 128
          %s1769 = scalar_lea.vmem [#allocation11], %s1768
          %1770 = dma.done %s1766, 2048
        $region88: #{tpu_custom_call.1} parent=83 // pred_fallthru
          _
      $region84: #{tpu_custom_call.1} parent=5 // pred_fallthru
        _
    $region6: #{tpu_custom_call.1} parent=1 // loop_footer
      %s27 = sadd.s32 1, %s23
    $region7: #{tpu_custom_call.1} parent=1 // loop_footer_branch
      %22 = sbr.rel target = $region3
    $region8: #{tpu_custom_call.1} parent=1 // loop_exit
      _
    %1771 = vsyncpa [#allocation3], 1
    %s1772 = scalar_lea.sflag [#allocation3], 1
    %1773 = vsyncpa %s1772, 1
    %1774 = vsyncpa [#allocation6], 1
    %1775 = vsyncpa [#allocation9], 1
    %1776 = vsyncpa [#allocation4], 1
    %s1777 = scalar_lea.sflag [#allocation4], 1
    %1778 = vsyncpa %s1777, 1

</llo_original>
